<compile_context>
chip_gen: v7x
topology: tpu7x:2x2x1
jax: 0.10.0
libtpu: 0.0.40
codegen_flags: <defaults>
</compile_context>

<pallas_src>
import functools

import jax
import jax.numpy as jnp
from jax.experimental import pallas as pl
from jax.experimental.pallas import tpu as pltpu


# ---------------------------------------------------------------------------
# Fused Pallas kernel (factory closes over static sizes)
# ---------------------------------------------------------------------------
def _make_fused_kernel(num_layers, T, B, H):
    def kernel(*refs):
        # refs layout:
        #   0                      : x_ref   (T*B, In)   time-major, f32
        #   1+3l, 2+3l, 3+3l       : wih_ref (feat,4H) bf16, whh_ref (H,4H) bf16,
        #                            b_ref (1,4H) f32 (b_ih + b_hh fused)
        #   1+3L, 2+3L             : wfc_ref (H, Cpad) bf16, bfc_ref (1, Cpad) f32
        #   3+3L                   : out_ref (num_layers*B, Cpad) f32
        x_ref = refs[0]
        wfc_ref = refs[1 + 3 * num_layers]
        bfc_ref = refs[2 + 3 * num_layers]
        out_ref = refs[3 + 3 * num_layers]

        def sigmoid(z):
            # Exact identity sigmoid(z) = 0.5*(1 + tanh(z/2)) — stays on the EUP
            # tanh path, avoids any VPU divide chain on the serial recurrence.
            return 0.5 * jnp.tanh(0.5 * z) + 0.5

        x_bf = x_ref[...].astype(jnp.bfloat16)  # (T*B, In) single load, one cast

        h_finals = []
        ys = None  # per-timestep outputs of the previous layer (list of (B,H) f32)
        for layer in range(num_layers):
            wih = refs[1 + 3 * layer][...]   # (feat, 4H)  bf16, pre-transposed
            whh = refs[2 + 3 * layer][...]   # (H, 4H)     bf16, pre-transposed
            b = refs[3 + 3 * layer][...]     # (1, 4H)     f32, b_ih + b_hh

            if layer == 0:
                # One batched input projection for ALL timesteps: off the serial
                # h-recurrence critical path, 1 MXU push instead of T tiny ones.
                xp_all = jnp.dot(x_bf, wih,
                                 preferred_element_type=jnp.float32) + b  # (T*B,4H)

            h = jnp.zeros((B, H), jnp.float32)
            c = jnp.zeros((B, H), jnp.float32)
            new_ys = []
            for t in range(T):
                if layer == 0:
                    xp = xp_all[t * B:(t + 1) * B, :]          # static sublane slice
                else:
                    # Wavefront-friendly: depends only on (layer-1, step t),
                    # independent of this layer's h@W_hh matmul for step t.
                    xp = jnp.dot(ys[t].astype(jnp.bfloat16), wih,
                                 preferred_element_type=jnp.float32) + b
                gates = xp + jnp.dot(h.astype(jnp.bfloat16), whh,
                                     preferred_element_type=jnp.float32)  # (B,4H) f32
                # Full-width nonlinearities (2 EUP pushes), slice AFTERWARDS.
                sig = sigmoid(gates)
                th = jnp.tanh(gates)
                i_g = sig[:, 0 * H:1 * H]
                f_g = sig[:, 1 * H:2 * H]
                g_g = th[:, 2 * H:3 * H]
                o_g = sig[:, 3 * H:4 * H]
                c = f_g * c + i_g * g_g
                h = o_g * jnp.tanh(c)
                new_ys.append(h)
            ys = new_ys                 # feed next layer per-step (wavefront DAG)
            h_finals.append(h)          # h_final == y[T-1]

        # (num_layers*B, H) — same row order as torch h_out.view(-1, H)
        h_flat = jnp.concatenate(h_finals, axis=0)

        # Fused FC heads: lane-dense (H, Cpad) weight, single unmasked store.
        out = (jnp.dot(h_flat.astype(jnp.bfloat16), wfc_ref[...],
                       preferred_element_type=jnp.float32) + bfc_ref[...])
        out_ref[...] = jnp.maximum(out, 0.0).astype(out_ref.dtype)

    return kernel


# ---------------------------------------------------------------------------
# Wrapper
# ---------------------------------------------------------------------------
@functools.partial(jax.jit, static_argnums=(2,))
def lstm_forward(x, params, num_layers):
    """Pallas implementation of LSTM.forward.

    x: (B, T, input_size) batch_first, matching the PyTorch module.
    Returns (out1, out2) with shapes (num_layers*B, num_classes1/2).
    """
    B, T, In = x.shape
    H = params["lstm"][0][1].shape[1]
    C1 = params["fc1_w"].shape[0]
    C2 = params["fc2_w"].shape[0]
    Cpad = max(128, pl.cdiv(C1 + C2, 128) * 128)   # lane-dense output width

    # Time-major 2-D input: one lane/sublane-friendly operand, one load in-kernel.
    x2d = jnp.transpose(x, (1, 0, 2)).reshape(T * B, In).astype(jnp.float32)

    args = [x2d]
    for layer in range(num_layers):
        w_ih, w_hh, b_ih, b_hh = params["lstm"][layer]
        args.append(jnp.transpose(w_ih).astype(jnp.bfloat16))          # (feat, 4H)
        args.append(jnp.transpose(w_hh).astype(jnp.bfloat16))          # (H, 4H)
        args.append((b_ih + b_hh).reshape(1, 4 * H).astype(jnp.float32))

    # Fused, lane-dense FC head weights: (H, Cpad) bf16 / (1, Cpad) f32
    w_fc = jnp.transpose(jnp.concatenate([params["fc1_w"], params["fc2_w"]], axis=0))
    w_fc = jnp.pad(w_fc, ((0, 0), (0, Cpad - (C1 + C2)))).astype(jnp.bfloat16)
    b_fc = jnp.concatenate([params["fc1_b"], params["fc2_b"]])
    b_fc = jnp.pad(b_fc, (0, Cpad - (C1 + C2))).reshape(1, Cpad).astype(jnp.float32)
    args += [w_fc, b_fc]

    # Advisory cost hint so XLA can overlap this tiny latency-bound call.
    flops = 2 * T * B * In * 4 * H                                    # layer-0 proj
    flops += num_layers * T * 2 * B * H * 4 * H                       # h @ W_hh per step
    flops += (num_layers - 1) * T * 2 * B * H * 4 * H                 # per-step proj, l>0
    flops += 2 * (num_layers * B) * H * Cpad                          # fused FC heads
    transcendentals = num_layers * T * (2 * B * 4 * H + B * H)
    bytes_accessed = (sum(int(a.size) * a.dtype.itemsize for a in args)
                      + num_layers * B * Cpad * 4)

    kernel = _make_fused_kernel(num_layers=num_layers, T=T, B=B, H=H)
    out = pl.pallas_call(
        kernel,
        out_shape=jax.ShapeDtypeStruct((num_layers * B, Cpad), jnp.float32),
        in_specs=[pl.BlockSpec(memory_space=pltpu.MemorySpace.VMEM) for _ in args],
        out_specs=pl.BlockSpec(memory_space=pltpu.MemorySpace.VMEM),
        cost_estimate=pl.CostEstimate(flops=flops,
                                      transcendentals=transcendentals,
                                      bytes_accessed=bytes_accessed),
    )(*args)

    return out[:, :C1], out[:, C1:C1 + C2]


# ---------------------------------------------------------------------------
# Pure-JAX reference (for correctness check, full f32)
# ---------------------------------------------------------------------------
def lstm_forward_ref(x, params, num_layers):
    B = x.shape[0]
    inp = jnp.transpose(x, (1, 0, 2))  # (T, B, In)
    h_finals = []
    for layer in range(num_layers):
        w_ih, w_hh, b_ih, b_hh = params["lstm"][layer]
        H = w_hh.shape[1]

        def step(carry, x_t):
            h, c = carry
            gates = x_t @ w_ih.T + b_ih + h @ w_hh.T + b_hh
            i = jax.nn.sigmoid(gates[:, 0 * H:1 * H])
            f = jax.nn.sigmoid(gates[:, 1 * H:2 * H])
            g = jnp.tanh(gates[:, 2 * H:3 * H])
            o = jax.nn.sigmoid(gates[:, 3 * H:4 * H])
            c = f * c + i * g
            h = o * jnp.tanh(c)
            return (h, c), h

        init = (jnp.zeros((B, H), jnp.float32), jnp.zeros((B, H), jnp.float32))
        (h_fin, _), ys = jax.lax.scan(step, init, inp)
        inp = ys
        h_finals.append(h_fin)
    h_flat = jnp.stack(h_finals, 0).reshape(-1, h_finals[0].shape[-1])
    o1 = jnp.maximum(h_flat @ params["fc1_w"].T + params["fc1_b"], 0.0)
    o2 = jnp.maximum(h_flat @ params["fc2_w"].T + params["fc2_b"], 0.0)
    return o1, o2


# ---------------------------------------------------------------------------
# Main
# ---------------------------------------------------------------------------
if __name__ == "__main__":
    # Module config (small, consistent with the forward pass)
    num_classes1, num_classes2 = 3, 5
    input_size, hidden_size = 4, 32
    num_layers, seq_length = 2, 8
    batch = 2

    key = jax.random.PRNGKey(0)
    bound = 1.0 / (hidden_size ** 0.5)

    def uni(k, shape):
        return jax.random.uniform(k, shape, jnp.float32, -bound, bound)

    keys = jax.random.split(key, 4 * num_layers + 5)
    lstm_params = []
    ki = 0
    for layer in range(num_layers):
        in_dim = input_size if layer == 0 else hidden_size
        w_ih = uni(keys[ki + 0], (4 * hidden_size, in_dim))
        w_hh = uni(keys[ki + 1], (4 * hidden_size, hidden_size))
        b_ih = uni(keys[ki + 2], (4 * hidden_size,))
        b_hh = uni(keys[ki + 3], (4 * hidden_size,))
        lstm_params.append((w_ih, w_hh, b_ih, b_hh))
        ki += 4

    params = {
        "lstm": lstm_params,
        "fc1_w": uni(keys[ki + 0], (num_classes1, hidden_size)),
        "fc1_b": uni(keys[ki + 1], (num_classes1,)),
        "fc2_w": uni(keys[ki + 2], (num_classes2, hidden_size)),
        "fc2_b": uni(keys[ki + 3], (num_classes2,)),
    }

    x = jax.random.normal(keys[ki + 4], (batch, seq_length, input_size), jnp.float32)

    out1, out2 = lstm_forward(x, params, num_layers)
    out1, out2 = jax.block_until_ready((out1, out2))

    ref1, ref2 = lstm_forward_ref(x, params, num_layers)
    assert out1.shape == (num_layers * batch, num_classes1)
    assert out2.shape == (num_layers * batch, num_classes2)
    # Tolerance loosened vs. a pure-f32 reference because matmul weight operands
    # are bf16 on the MXU (accumulation and elementwise math remain f32).
    assert jnp.allclose(out1, ref1, atol=2e-2, rtol=2e-2)
    assert jnp.allclose(out2, ref2, atol=2e-2, rtol=2e-2)

    print("KERNEL_OK")
</pallas_src>

<mosaic_0001>
module attributes {stable_mosaic.version = 11 : i64} {
  func.func @kernel(%arg0: memref<16x4xf32, #tpu.memory_space<vmem>>, %arg1: memref<4x128xbf16, #tpu.memory_space<vmem>>, %arg2: memref<32x128xbf16, #tpu.memory_space<vmem>>, %arg3: memref<1x128xf32, #tpu.memory_space<vmem>>, %arg4: memref<32x128xbf16, #tpu.memory_space<vmem>>, %arg5: memref<32x128xbf16, #tpu.memory_space<vmem>>, %arg6: memref<1x128xf32, #tpu.memory_space<vmem>>, %arg7: memref<32x128xbf16, #tpu.memory_space<vmem>>, %arg8: memref<1x128xf32, #tpu.memory_space<vmem>>, %arg9: memref<4x128xf32, #tpu.memory_space<vmem>>) attributes {dimension_semantics = [], scalar_prefetch = 0 : i64, scratch_operands = 0 : i64, tpu.core_type = #tpu.core_type<tc>} {
    %c0 = arith.constant 0 : index
    %c0_0 = arith.constant 0 : index
    %0 = vector.load %arg0[%c0, %c0_0] : memref<16x4xf32, #tpu.memory_space<vmem>>, vector<16x4xf32>
    %1 = arith.truncf %0 : vector<16x4xf32> to vector<16x4xbf16>
    %c0_1 = arith.constant 0 : index
    %c0_2 = arith.constant 0 : index
    %2 = vector.load %arg1[%c0_1, %c0_2] : memref<4x128xbf16, #tpu.memory_space<vmem>>, vector<4x128xbf16>
    %c0_3 = arith.constant 0 : index
    %c0_4 = arith.constant 0 : index
    %3 = vector.load %arg2[%c0_3, %c0_4] : memref<32x128xbf16, #tpu.memory_space<vmem>>, vector<32x128xbf16>
    %c0_5 = arith.constant 0 : index
    %c0_6 = arith.constant 0 : index
    %4 = vector.load %arg3[%c0_5, %c0_6] : memref<1x128xf32, #tpu.memory_space<vmem>>, vector<1x128xf32>
    %cst = arith.constant dense<0.000000e+00> : vector<16x128xf32>
    %5 = tpu.matmul %1, %2, %cst {dimension_numbers = #tpu.dot_dimension_numbers<[1], [0], [0], [1], [0, 0, 1, 1], [], []>} : vector<16x4xbf16>, vector<4x128xbf16>, vector<16x128xf32> -> vector<16x128xf32>
    %6 = vector.broadcast %4 : vector<1x128xf32> to vector<16x128xf32>
    %7 = arith.addf %5, %6 : vector<16x128xf32>
    %cst_7 = arith.constant 0.000000e+00 : f32
    %8 = vector.broadcast %cst_7 : f32 to vector<2x32xf32>
    %cst_8 = arith.constant 0.000000e+00 : f32
    %9 = vector.broadcast %cst_8 : f32 to vector<2x32xf32>
    %10 = vector.extract_strided_slice %7 {offsets = [0, 0], sizes = [2, 128], strides = [1, 1]} : vector<16x128xf32> to vector<2x128xf32>
    %11 = arith.truncf %8 : vector<2x32xf32> to vector<2x32xbf16>
    %cst_9 = arith.constant dense<0.000000e+00> : vector<2x128xf32>
    %12 = tpu.matmul %11, %3, %cst_9 {dimension_numbers = #tpu.dot_dimension_numbers<[1], [0], [0], [1], [0, 0, 1, 1], [], []>} : vector<2x32xbf16>, vector<32x128xbf16>, vector<2x128xf32> -> vector<2x128xf32>
    %13 = arith.addf %10, %12 : vector<2x128xf32>
    %cst_10 = arith.constant 5.000000e-01 : f32
    %14 = vector.broadcast %cst_10 : f32 to vector<2x128xf32>
    %15 = arith.mulf %14, %13 : vector<2x128xf32>
    %16 = math.tanh %15 : vector<2x128xf32>
    %cst_11 = arith.constant 5.000000e-01 : f32
    %17 = vector.broadcast %cst_11 : f32 to vector<2x128xf32>
    %18 = arith.mulf %17, %16 : vector<2x128xf32>
    %cst_12 = arith.constant 5.000000e-01 : f32
    %19 = vector.broadcast %cst_12 : f32 to vector<2x128xf32>
    %20 = arith.addf %18, %19 : vector<2x128xf32>
    %21 = math.tanh %13 : vector<2x128xf32>
    %22 = vector.extract_strided_slice %20 {offsets = [0, 0], sizes = [2, 32], strides = [1, 1]} : vector<2x128xf32> to vector<2x32xf32>
    %23 = vector.extract_strided_slice %20 {offsets = [0, 32], sizes = [2, 32], strides = [1, 1]} : vector<2x128xf32> to vector<2x32xf32>
    %24 = vector.extract_strided_slice %21 {offsets = [0, 64], sizes = [2, 32], strides = [1, 1]} : vector<2x128xf32> to vector<2x32xf32>
    %25 = vector.extract_strided_slice %20 {offsets = [0, 96], sizes = [2, 32], strides = [1, 1]} : vector<2x128xf32> to vector<2x32xf32>
    %26 = arith.mulf %23, %9 : vector<2x32xf32>
    %27 = arith.mulf %22, %24 : vector<2x32xf32>
    %28 = arith.addf %26, %27 : vector<2x32xf32>
    %29 = math.tanh %28 : vector<2x32xf32>
    %30 = arith.mulf %25, %29 : vector<2x32xf32>
    %31 = vector.extract_strided_slice %7 {offsets = [2, 0], sizes = [2, 128], strides = [1, 1]} : vector<16x128xf32> to vector<2x128xf32>
    %32 = arith.truncf %30 : vector<2x32xf32> to vector<2x32xbf16>
    %cst_13 = arith.constant dense<0.000000e+00> : vector<2x128xf32>
    %33 = tpu.matmul %32, %3, %cst_13 {dimension_numbers = #tpu.dot_dimension_numbers<[1], [0], [0], [1], [0, 0, 1, 1], [], []>} : vector<2x32xbf16>, vector<32x128xbf16>, vector<2x128xf32> -> vector<2x128xf32>
    %34 = arith.addf %31, %33 : vector<2x128xf32>
    %cst_14 = arith.constant 5.000000e-01 : f32
    %35 = vector.broadcast %cst_14 : f32 to vector<2x128xf32>
    %36 = arith.mulf %35, %34 : vector<2x128xf32>
    %37 = math.tanh %36 : vector<2x128xf32>
    %cst_15 = arith.constant 5.000000e-01 : f32
    %38 = vector.broadcast %cst_15 : f32 to vector<2x128xf32>
    %39 = arith.mulf %38, %37 : vector<2x128xf32>
    %cst_16 = arith.constant 5.000000e-01 : f32
    %40 = vector.broadcast %cst_16 : f32 to vector<2x128xf32>
    %41 = arith.addf %39, %40 : vector<2x128xf32>
    %42 = math.tanh %34 : vector<2x128xf32>
    %43 = vector.extract_strided_slice %41 {offsets = [0, 0], sizes = [2, 32], strides = [1, 1]} : vector<2x128xf32> to vector<2x32xf32>
    %44 = vector.extract_strided_slice %41 {offsets = [0, 32], sizes = [2, 32], strides = [1, 1]} : vector<2x128xf32> to vector<2x32xf32>
    %45 = vector.extract_strided_slice %42 {offsets = [0, 64], sizes = [2, 32], strides = [1, 1]} : vector<2x128xf32> to vector<2x32xf32>
    %46 = vector.extract_strided_slice %41 {offsets = [0, 96], sizes = [2, 32], strides = [1, 1]} : vector<2x128xf32> to vector<2x32xf32>
    %47 = arith.mulf %44, %28 : vector<2x32xf32>
    %48 = arith.mulf %43, %45 : vector<2x32xf32>
    %49 = arith.addf %47, %48 : vector<2x32xf32>
    %50 = math.tanh %49 : vector<2x32xf32>
    %51 = arith.mulf %46, %50 : vector<2x32xf32>
    %52 = vector.extract_strided_slice %7 {offsets = [4, 0], sizes = [2, 128], strides = [1, 1]} : vector<16x128xf32> to vector<2x128xf32>
    %53 = arith.truncf %51 : vector<2x32xf32> to vector<2x32xbf16>
    %cst_17 = arith.constant dense<0.000000e+00> : vector<2x128xf32>
    %54 = tpu.matmul %53, %3, %cst_17 {dimension_numbers = #tpu.dot_dimension_numbers<[1], [0], [0], [1], [0, 0, 1, 1], [], []>} : vector<2x32xbf16>, vector<32x128xbf16>, vector<2x128xf32> -> vector<2x128xf32>
    %55 = arith.addf %52, %54 : vector<2x128xf32>
    %cst_18 = arith.constant 5.000000e-01 : f32
    %56 = vector.broadcast %cst_18 : f32 to vector<2x128xf32>
    %57 = arith.mulf %56, %55 : vector<2x128xf32>
    %58 = math.tanh %57 : vector<2x128xf32>
    %cst_19 = arith.constant 5.000000e-01 : f32
    %59 = vector.broadcast %cst_19 : f32 to vector<2x128xf32>
    %60 = arith.mulf %59, %58 : vector<2x128xf32>
    %cst_20 = arith.constant 5.000000e-01 : f32
    %61 = vector.broadcast %cst_20 : f32 to vector<2x128xf32>
    %62 = arith.addf %60, %61 : vector<2x128xf32>
    %63 = math.tanh %55 : vector<2x128xf32>
    %64 = vector.extract_strided_slice %62 {offsets = [0, 0], sizes = [2, 32], strides = [1, 1]} : vector<2x128xf32> to vector<2x32xf32>
    %65 = vector.extract_strided_slice %62 {offsets = [0, 32], sizes = [2, 32], strides = [1, 1]} : vector<2x128xf32> to vector<2x32xf32>
    %66 = vector.extract_strided_slice %63 {offsets = [0, 64], sizes = [2, 32], strides = [1, 1]} : vector<2x128xf32> to vector<2x32xf32>
    %67 = vector.extract_strided_slice %62 {offsets = [0, 96], sizes = [2, 32], strides = [1, 1]} : vector<2x128xf32> to vector<2x32xf32>
    %68 = arith.mulf %65, %49 : vector<2x32xf32>
    %69 = arith.mulf %64, %66 : vector<2x32xf32>
    %70 = arith.addf %68, %69 : vector<2x32xf32>
    %71 = math.tanh %70 : vector<2x32xf32>
    %72 = arith.mulf %67, %71 : vector<2x32xf32>
    %73 = vector.extract_strided_slice %7 {offsets = [6, 0], sizes = [2, 128], strides = [1, 1]} : vector<16x128xf32> to vector<2x128xf32>
    %74 = arith.truncf %72 : vector<2x32xf32> to vector<2x32xbf16>
    %cst_21 = arith.constant dense<0.000000e+00> : vector<2x128xf32>
    %75 = tpu.matmul %74, %3, %cst_21 {dimension_numbers = #tpu.dot_dimension_numbers<[1], [0], [0], [1], [0, 0, 1, 1], [], []>} : vector<2x32xbf16>, vector<32x128xbf16>, vector<2x128xf32> -> vector<2x128xf32>
    %76 = arith.addf %73, %75 : vector<2x128xf32>
    %cst_22 = arith.constant 5.000000e-01 : f32
    %77 = vector.broadcast %cst_22 : f32 to vector<2x128xf32>
    %78 = arith.mulf %77, %76 : vector<2x128xf32>
    %79 = math.tanh %78 : vector<2x128xf32>
    %cst_23 = arith.constant 5.000000e-01 : f32
    %80 = vector.broadcast %cst_23 : f32 to vector<2x128xf32>
    %81 = arith.mulf %80, %79 : vector<2x128xf32>
    %cst_24 = arith.constant 5.000000e-01 : f32
    %82 = vector.broadcast %cst_24 : f32 to vector<2x128xf32>
    %83 = arith.addf %81, %82 : vector<2x128xf32>
    %84 = math.tanh %76 : vector<2x128xf32>
    %85 = vector.extract_strided_slice %83 {offsets = [0, 0], sizes = [2, 32], strides = [1, 1]} : vector<2x128xf32> to vector<2x32xf32>
    %86 = vector.extract_strided_slice %83 {offsets = [0, 32], sizes = [2, 32], strides = [1, 1]} : vector<2x128xf32> to vector<2x32xf32>
    %87 = vector.extract_strided_slice %84 {offsets = [0, 64], sizes = [2, 32], strides = [1, 1]} : vector<2x128xf32> to vector<2x32xf32>
    %88 = vector.extract_strided_slice %83 {offsets = [0, 96], sizes = [2, 32], strides = [1, 1]} : vector<2x128xf32> to vector<2x32xf32>
    %89 = arith.mulf %86, %70 : vector<2x32xf32>
    %90 = arith.mulf %85, %87 : vector<2x32xf32>
    %91 = arith.addf %89, %90 : vector<2x32xf32>
    %92 = math.tanh %91 : vector<2x32xf32>
    %93 = arith.mulf %88, %92 : vector<2x32xf32>
    %94 = vector.extract_strided_slice %7 {offsets = [8, 0], sizes = [2, 128], strides = [1, 1]} : vector<16x128xf32> to vector<2x128xf32>
    %95 = arith.truncf %93 : vector<2x32xf32> to vector<2x32xbf16>
    %cst_25 = arith.constant dense<0.000000e+00> : vector<2x128xf32>
    %96 = tpu.matmul %95, %3, %cst_25 {dimension_numbers = #tpu.dot_dimension_numbers<[1], [0], [0], [1], [0, 0, 1, 1], [], []>} : vector<2x32xbf16>, vector<32x128xbf16>, vector<2x128xf32> -> vector<2x128xf32>
    %97 = arith.addf %94, %96 : vector<2x128xf32>
    %cst_26 = arith.constant 5.000000e-01 : f32
    %98 = vector.broadcast %cst_26 : f32 to vector<2x128xf32>
    %99 = arith.mulf %98, %97 : vector<2x128xf32>
    %100 = math.tanh %99 : vector<2x128xf32>
    %cst_27 = arith.constant 5.000000e-01 : f32
    %101 = vector.broadcast %cst_27 : f32 to vector<2x128xf32>
    %102 = arith.mulf %101, %100 : vector<2x128xf32>
    %cst_28 = arith.constant 5.000000e-01 : f32
    %103 = vector.broadcast %cst_28 : f32 to vector<2x128xf32>
    %104 = arith.addf %102, %103 : vector<2x128xf32>
    %105 = math.tanh %97 : vector<2x128xf32>
    %106 = vector.extract_strided_slice %104 {offsets = [0, 0], sizes = [2, 32], strides = [1, 1]} : vector<2x128xf32> to vector<2x32xf32>
    %107 = vector.extract_strided_slice %104 {offsets = [0, 32], sizes = [2, 32], strides = [1, 1]} : vector<2x128xf32> to vector<2x32xf32>
    %108 = vector.extract_strided_slice %105 {offsets = [0, 64], sizes = [2, 32], strides = [1, 1]} : vector<2x128xf32> to vector<2x32xf32>
    %109 = vector.extract_strided_slice %104 {offsets = [0, 96], sizes = [2, 32], strides = [1, 1]} : vector<2x128xf32> to vector<2x32xf32>
    %110 = arith.mulf %107, %91 : vector<2x32xf32>
    %111 = arith.mulf %106, %108 : vector<2x32xf32>
    %112 = arith.addf %110, %111 : vector<2x32xf32>
    %113 = math.tanh %112 : vector<2x32xf32>
    %114 = arith.mulf %109, %113 : vector<2x32xf32>
    %115 = vector.extract_strided_slice %7 {offsets = [10, 0], sizes = [2, 128], strides = [1, 1]} : vector<16x128xf32> to vector<2x128xf32>
    %116 = arith.truncf %114 : vector<2x32xf32> to vector<2x32xbf16>
    %cst_29 = arith.constant dense<0.000000e+00> : vector<2x128xf32>
    %117 = tpu.matmul %116, %3, %cst_29 {dimension_numbers = #tpu.dot_dimension_numbers<[1], [0], [0], [1], [0, 0, 1, 1], [], []>} : vector<2x32xbf16>, vector<32x128xbf16>, vector<2x128xf32> -> vector<2x128xf32>
    %118 = arith.addf %115, %117 : vector<2x128xf32>
    %cst_30 = arith.constant 5.000000e-01 : f32
    %119 = vector.broadcast %cst_30 : f32 to vector<2x128xf32>
    %120 = arith.mulf %119, %118 : vector<2x128xf32>
    %121 = math.tanh %120 : vector<2x128xf32>
    %cst_31 = arith.constant 5.000000e-01 : f32
    %122 = vector.broadcast %cst_31 : f32 to vector<2x128xf32>
    %123 = arith.mulf %122, %121 : vector<2x128xf32>
    %cst_32 = arith.constant 5.000000e-01 : f32
    %124 = vector.broadcast %cst_32 : f32 to vector<2x128xf32>
    %125 = arith.addf %123, %124 : vector<2x128xf32>
    %126 = math.tanh %118 : vector<2x128xf32>
    %127 = vector.extract_strided_slice %125 {offsets = [0, 0], sizes = [2, 32], strides = [1, 1]} : vector<2x128xf32> to vector<2x32xf32>
    %128 = vector.extract_strided_slice %125 {offsets = [0, 32], sizes = [2, 32], strides = [1, 1]} : vector<2x128xf32> to vector<2x32xf32>
    %129 = vector.extract_strided_slice %126 {offsets = [0, 64], sizes = [2, 32], strides = [1, 1]} : vector<2x128xf32> to vector<2x32xf32>
    %130 = vector.extract_strided_slice %125 {offsets = [0, 96], sizes = [2, 32], strides = [1, 1]} : vector<2x128xf32> to vector<2x32xf32>
    %131 = arith.mulf %128, %112 : vector<2x32xf32>
    %132 = arith.mulf %127, %129 : vector<2x32xf32>
    %133 = arith.addf %131, %132 : vector<2x32xf32>
    %134 = math.tanh %133 : vector<2x32xf32>
    %135 = arith.mulf %130, %134 : vector<2x32xf32>
    %136 = vector.extract_strided_slice %7 {offsets = [12, 0], sizes = [2, 128], strides = [1, 1]} : vector<16x128xf32> to vector<2x128xf32>
    %137 = arith.truncf %135 : vector<2x32xf32> to vector<2x32xbf16>
    %cst_33 = arith.constant dense<0.000000e+00> : vector<2x128xf32>
    %138 = tpu.matmul %137, %3, %cst_33 {dimension_numbers = #tpu.dot_dimension_numbers<[1], [0], [0], [1], [0, 0, 1, 1], [], []>} : vector<2x32xbf16>, vector<32x128xbf16>, vector<2x128xf32> -> vector<2x128xf32>
    %139 = arith.addf %136, %138 : vector<2x128xf32>
    %cst_34 = arith.constant 5.000000e-01 : f32
    %140 = vector.broadcast %cst_34 : f32 to vector<2x128xf32>
    %141 = arith.mulf %140, %139 : vector<2x128xf32>
    %142 = math.tanh %141 : vector<2x128xf32>
    %cst_35 = arith.constant 5.000000e-01 : f32
    %143 = vector.broadcast %cst_35 : f32 to vector<2x128xf32>
    %144 = arith.mulf %143, %142 : vector<2x128xf32>
    %cst_36 = arith.constant 5.000000e-01 : f32
    %145 = vector.broadcast %cst_36 : f32 to vector<2x128xf32>
    %146 = arith.addf %144, %145 : vector<2x128xf32>
    %147 = math.tanh %139 : vector<2x128xf32>
    %148 = vector.extract_strided_slice %146 {offsets = [0, 0], sizes = [2, 32], strides = [1, 1]} : vector<2x128xf32> to vector<2x32xf32>
    %149 = vector.extract_strided_slice %146 {offsets = [0, 32], sizes = [2, 32], strides = [1, 1]} : vector<2x128xf32> to vector<2x32xf32>
    %150 = vector.extract_strided_slice %147 {offsets = [0, 64], sizes = [2, 32], strides = [1, 1]} : vector<2x128xf32> to vector<2x32xf32>
    %151 = vector.extract_strided_slice %146 {offsets = [0, 96], sizes = [2, 32], strides = [1, 1]} : vector<2x128xf32> to vector<2x32xf32>
    %152 = arith.mulf %149, %133 : vector<2x32xf32>
    %153 = arith.mulf %148, %150 : vector<2x32xf32>
    %154 = arith.addf %152, %153 : vector<2x32xf32>
    %155 = math.tanh %154 : vector<2x32xf32>
    %156 = arith.mulf %151, %155 : vector<2x32xf32>
    %157 = vector.extract_strided_slice %7 {offsets = [14, 0], sizes = [2, 128], strides = [1, 1]} : vector<16x128xf32> to vector<2x128xf32>
    %158 = arith.truncf %156 : vector<2x32xf32> to vector<2x32xbf16>
    %cst_37 = arith.constant dense<0.000000e+00> : vector<2x128xf32>
    %159 = tpu.matmul %158, %3, %cst_37 {dimension_numbers = #tpu.dot_dimension_numbers<[1], [0], [0], [1], [0, 0, 1, 1], [], []>} : vector<2x32xbf16>, vector<32x128xbf16>, vector<2x128xf32> -> vector<2x128xf32>
    %160 = arith.addf %157, %159 : vector<2x128xf32>
    %cst_38 = arith.constant 5.000000e-01 : f32
    %161 = vector.broadcast %cst_38 : f32 to vector<2x128xf32>
    %162 = arith.mulf %161, %160 : vector<2x128xf32>
    %163 = math.tanh %162 : vector<2x128xf32>
    %cst_39 = arith.constant 5.000000e-01 : f32
    %164 = vector.broadcast %cst_39 : f32 to vector<2x128xf32>
    %165 = arith.mulf %164, %163 : vector<2x128xf32>
    %cst_40 = arith.constant 5.000000e-01 : f32
    %166 = vector.broadcast %cst_40 : f32 to vector<2x128xf32>
    %167 = arith.addf %165, %166 : vector<2x128xf32>
    %168 = math.tanh %160 : vector<2x128xf32>
    %169 = vector.extract_strided_slice %167 {offsets = [0, 0], sizes = [2, 32], strides = [1, 1]} : vector<2x128xf32> to vector<2x32xf32>
    %170 = vector.extract_strided_slice %167 {offsets = [0, 32], sizes = [2, 32], strides = [1, 1]} : vector<2x128xf32> to vector<2x32xf32>
    %171 = vector.extract_strided_slice %168 {offsets = [0, 64], sizes = [2, 32], strides = [1, 1]} : vector<2x128xf32> to vector<2x32xf32>
    %172 = vector.extract_strided_slice %167 {offsets = [0, 96], sizes = [2, 32], strides = [1, 1]} : vector<2x128xf32> to vector<2x32xf32>
    %173 = arith.mulf %170, %154 : vector<2x32xf32>
    %174 = arith.mulf %169, %171 : vector<2x32xf32>
    %175 = arith.addf %173, %174 : vector<2x32xf32>
    %176 = math.tanh %175 : vector<2x32xf32>
    %177 = arith.mulf %172, %176 : vector<2x32xf32>
    %c0_41 = arith.constant 0 : index
    %c0_42 = arith.constant 0 : index
    %178 = vector.load %arg4[%c0_41, %c0_42] : memref<32x128xbf16, #tpu.memory_space<vmem>>, vector<32x128xbf16>
    %c0_43 = arith.constant 0 : index
    %c0_44 = arith.constant 0 : index
    %179 = vector.load %arg5[%c0_43, %c0_44] : memref<32x128xbf16, #tpu.memory_space<vmem>>, vector<32x128xbf16>
    %c0_45 = arith.constant 0 : index
    %c0_46 = arith.constant 0 : index
    %180 = vector.load %arg6[%c0_45, %c0_46] : memref<1x128xf32, #tpu.memory_space<vmem>>, vector<1x128xf32>
    %cst_47 = arith.constant 0.000000e+00 : f32
    %181 = vector.broadcast %cst_47 : f32 to vector<2x32xf32>
    %cst_48 = arith.constant 0.000000e+00 : f32
    %182 = vector.broadcast %cst_48 : f32 to vector<2x32xf32>
    %183 = arith.truncf %30 : vector<2x32xf32> to vector<2x32xbf16>
    %cst_49 = arith.constant dense<0.000000e+00> : vector<2x128xf32>
    %184 = tpu.matmul %183, %178, %cst_49 {dimension_numbers = #tpu.dot_dimension_numbers<[1], [0], [0], [1], [0, 0, 1, 1], [], []>} : vector<2x32xbf16>, vector<32x128xbf16>, vector<2x128xf32> -> vector<2x128xf32>
    %185 = vector.broadcast %180 : vector<1x128xf32> to vector<2x128xf32>
    %186 = arith.addf %184, %185 : vector<2x128xf32>
    %187 = arith.truncf %181 : vector<2x32xf32> to vector<2x32xbf16>
    %cst_50 = arith.constant dense<0.000000e+00> : vector<2x128xf32>
    %188 = tpu.matmul %187, %179, %cst_50 {dimension_numbers = #tpu.dot_dimension_numbers<[1], [0], [0], [1], [0, 0, 1, 1], [], []>} : vector<2x32xbf16>, vector<32x128xbf16>, vector<2x128xf32> -> vector<2x128xf32>
    %189 = arith.addf %186, %188 : vector<2x128xf32>
    %cst_51 = arith.constant 5.000000e-01 : f32
    %190 = vector.broadcast %cst_51 : f32 to vector<2x128xf32>
    %191 = arith.mulf %190, %189 : vector<2x128xf32>
    %192 = math.tanh %191 : vector<2x128xf32>
    %cst_52 = arith.constant 5.000000e-01 : f32
    %193 = vector.broadcast %cst_52 : f32 to vector<2x128xf32>
    %194 = arith.mulf %193, %192 : vector<2x128xf32>
    %cst_53 = arith.constant 5.000000e-01 : f32
    %195 = vector.broadcast %cst_53 : f32 to vector<2x128xf32>
    %196 = arith.addf %194, %195 : vector<2x128xf32>
    %197 = math.tanh %189 : vector<2x128xf32>
    %198 = vector.extract_strided_slice %196 {offsets = [0, 0], sizes = [2, 32], strides = [1, 1]} : vector<2x128xf32> to vector<2x32xf32>
    %199 = vector.extract_strided_slice %196 {offsets = [0, 32], sizes = [2, 32], strides = [1, 1]} : vector<2x128xf32> to vector<2x32xf32>
    %200 = vector.extract_strided_slice %197 {offsets = [0, 64], sizes = [2, 32], strides = [1, 1]} : vector<2x128xf32> to vector<2x32xf32>
    %201 = vector.extract_strided_slice %196 {offsets = [0, 96], sizes = [2, 32], strides = [1, 1]} : vector<2x128xf32> to vector<2x32xf32>
    %202 = arith.mulf %199, %182 : vector<2x32xf32>
    %203 = arith.mulf %198, %200 : vector<2x32xf32>
    %204 = arith.addf %202, %203 : vector<2x32xf32>
    %205 = math.tanh %204 : vector<2x32xf32>
    %206 = arith.mulf %201, %205 : vector<2x32xf32>
    %207 = arith.truncf %51 : vector<2x32xf32> to vector<2x32xbf16>
    %cst_54 = arith.constant dense<0.000000e+00> : vector<2x128xf32>
    %208 = tpu.matmul %207, %178, %cst_54 {dimension_numbers = #tpu.dot_dimension_numbers<[1], [0], [0], [1], [0, 0, 1, 1], [], []>} : vector<2x32xbf16>, vector<32x128xbf16>, vector<2x128xf32> -> vector<2x128xf32>
    %209 = vector.broadcast %180 : vector<1x128xf32> to vector<2x128xf32>
    %210 = arith.addf %208, %209 : vector<2x128xf32>
    %211 = arith.truncf %206 : vector<2x32xf32> to vector<2x32xbf16>
    %cst_55 = arith.constant dense<0.000000e+00> : vector<2x128xf32>
    %212 = tpu.matmul %211, %179, %cst_55 {dimension_numbers = #tpu.dot_dimension_numbers<[1], [0], [0], [1], [0, 0, 1, 1], [], []>} : vector<2x32xbf16>, vector<32x128xbf16>, vector<2x128xf32> -> vector<2x128xf32>
    %213 = arith.addf %210, %212 : vector<2x128xf32>
    %cst_56 = arith.constant 5.000000e-01 : f32
    %214 = vector.broadcast %cst_56 : f32 to vector<2x128xf32>
    %215 = arith.mulf %214, %213 : vector<2x128xf32>
    %216 = math.tanh %215 : vector<2x128xf32>
    %cst_57 = arith.constant 5.000000e-01 : f32
    %217 = vector.broadcast %cst_57 : f32 to vector<2x128xf32>
    %218 = arith.mulf %217, %216 : vector<2x128xf32>
    %cst_58 = arith.constant 5.000000e-01 : f32
    %219 = vector.broadcast %cst_58 : f32 to vector<2x128xf32>
    %220 = arith.addf %218, %219 : vector<2x128xf32>
    %221 = math.tanh %213 : vector<2x128xf32>
    %222 = vector.extract_strided_slice %220 {offsets = [0, 0], sizes = [2, 32], strides = [1, 1]} : vector<2x128xf32> to vector<2x32xf32>
    %223 = vector.extract_strided_slice %220 {offsets = [0, 32], sizes = [2, 32], strides = [1, 1]} : vector<2x128xf32> to vector<2x32xf32>
    %224 = vector.extract_strided_slice %221 {offsets = [0, 64], sizes = [2, 32], strides = [1, 1]} : vector<2x128xf32> to vector<2x32xf32>
    %225 = vector.extract_strided_slice %220 {offsets = [0, 96], sizes = [2, 32], strides = [1, 1]} : vector<2x128xf32> to vector<2x32xf32>
    %226 = arith.mulf %223, %204 : vector<2x32xf32>
    %227 = arith.mulf %222, %224 : vector<2x32xf32>
    %228 = arith.addf %226, %227 : vector<2x32xf32>
    %229 = math.tanh %228 : vector<2x32xf32>
    %230 = arith.mulf %225, %229 : vector<2x32xf32>
    %231 = arith.truncf %72 : vector<2x32xf32> to vector<2x32xbf16>
    %cst_59 = arith.constant dense<0.000000e+00> : vector<2x128xf32>
    %232 = tpu.matmul %231, %178, %cst_59 {dimension_numbers = #tpu.dot_dimension_numbers<[1], [0], [0], [1], [0, 0, 1, 1], [], []>} : vector<2x32xbf16>, vector<32x128xbf16>, vector<2x128xf32> -> vector<2x128xf32>
    %233 = vector.broadcast %180 : vector<1x128xf32> to vector<2x128xf32>
    %234 = arith.addf %232, %233 : vector<2x128xf32>
    %235 = arith.truncf %230 : vector<2x32xf32> to vector<2x32xbf16>
    %cst_60 = arith.constant dense<0.000000e+00> : vector<2x128xf32>
    %236 = tpu.matmul %235, %179, %cst_60 {dimension_numbers = #tpu.dot_dimension_numbers<[1], [0], [0], [1], [0, 0, 1, 1], [], []>} : vector<2x32xbf16>, vector<32x128xbf16>, vector<2x128xf32> -> vector<2x128xf32>
    %237 = arith.addf %234, %236 : vector<2x128xf32>
    %cst_61 = arith.constant 5.000000e-01 : f32
    %238 = vector.broadcast %cst_61 : f32 to vector<2x128xf32>
    %239 = arith.mulf %238, %237 : vector<2x128xf32>
    %240 = math.tanh %239 : vector<2x128xf32>
    %cst_62 = arith.constant 5.000000e-01 : f32
    %241 = vector.broadcast %cst_62 : f32 to vector<2x128xf32>
    %242 = arith.mulf %241, %240 : vector<2x128xf32>
    %cst_63 = arith.constant 5.000000e-01 : f32
    %243 = vector.broadcast %cst_63 : f32 to vector<2x128xf32>
    %244 = arith.addf %242, %243 : vector<2x128xf32>
    %245 = math.tanh %237 : vector<2x128xf32>
    %246 = vector.extract_strided_slice %244 {offsets = [0, 0], sizes = [2, 32], strides = [1, 1]} : vector<2x128xf32> to vector<2x32xf32>
    %247 = vector.extract_strided_slice %244 {offsets = [0, 32], sizes = [2, 32], strides = [1, 1]} : vector<2x128xf32> to vector<2x32xf32>
    %248 = vector.extract_strided_slice %245 {offsets = [0, 64], sizes = [2, 32], strides = [1, 1]} : vector<2x128xf32> to vector<2x32xf32>
    %249 = vector.extract_strided_slice %244 {offsets = [0, 96], sizes = [2, 32], strides = [1, 1]} : vector<2x128xf32> to vector<2x32xf32>
    %250 = arith.mulf %247, %228 : vector<2x32xf32>
    %251 = arith.mulf %246, %248 : vector<2x32xf32>
    %252 = arith.addf %250, %251 : vector<2x32xf32>
    %253 = math.tanh %252 : vector<2x32xf32>
    %254 = arith.mulf %249, %253 : vector<2x32xf32>
    %255 = arith.truncf %93 : vector<2x32xf32> to vector<2x32xbf16>
    %cst_64 = arith.constant dense<0.000000e+00> : vector<2x128xf32>
    %256 = tpu.matmul %255, %178, %cst_64 {dimension_numbers = #tpu.dot_dimension_numbers<[1], [0], [0], [1], [0, 0, 1, 1], [], []>} : vector<2x32xbf16>, vector<32x128xbf16>, vector<2x128xf32> -> vector<2x128xf32>
    %257 = vector.broadcast %180 : vector<1x128xf32> to vector<2x128xf32>
    %258 = arith.addf %256, %257 : vector<2x128xf32>
    %259 = arith.truncf %254 : vector<2x32xf32> to vector<2x32xbf16>
    %cst_65 = arith.constant dense<0.000000e+00> : vector<2x128xf32>
    %260 = tpu.matmul %259, %179, %cst_65 {dimension_numbers = #tpu.dot_dimension_numbers<[1], [0], [0], [1], [0, 0, 1, 1], [], []>} : vector<2x32xbf16>, vector<32x128xbf16>, vector<2x128xf32> -> vector<2x128xf32>
    %261 = arith.addf %258, %260 : vector<2x128xf32>
    %cst_66 = arith.constant 5.000000e-01 : f32
    %262 = vector.broadcast %cst_66 : f32 to vector<2x128xf32>
    %263 = arith.mulf %262, %261 : vector<2x128xf32>
    %264 = math.tanh %263 : vector<2x128xf32>
    %cst_67 = arith.constant 5.000000e-01 : f32
    %265 = vector.broadcast %cst_67 : f32 to vector<2x128xf32>
    %266 = arith.mulf %265, %264 : vector<2x128xf32>
    %cst_68 = arith.constant 5.000000e-01 : f32
    %267 = vector.broadcast %cst_68 : f32 to vector<2x128xf32>
    %268 = arith.addf %266, %267 : vector<2x128xf32>
    %269 = math.tanh %261 : vector<2x128xf32>
    %270 = vector.extract_strided_slice %268 {offsets = [0, 0], sizes = [2, 32], strides = [1, 1]} : vector<2x128xf32> to vector<2x32xf32>
    %271 = vector.extract_strided_slice %268 {offsets = [0, 32], sizes = [2, 32], strides = [1, 1]} : vector<2x128xf32> to vector<2x32xf32>
    %272 = vector.extract_strided_slice %269 {offsets = [0, 64], sizes = [2, 32], strides = [1, 1]} : vector<2x128xf32> to vector<2x32xf32>
    %273 = vector.extract_strided_slice %268 {offsets = [0, 96], sizes = [2, 32], strides = [1, 1]} : vector<2x128xf32> to vector<2x32xf32>
    %274 = arith.mulf %271, %252 : vector<2x32xf32>
    %275 = arith.mulf %270, %272 : vector<2x32xf32>
    %276 = arith.addf %274, %275 : vector<2x32xf32>
    %277 = math.tanh %276 : vector<2x32xf32>
    %278 = arith.mulf %273, %277 : vector<2x32xf32>
    %279 = arith.truncf %114 : vector<2x32xf32> to vector<2x32xbf16>
    %cst_69 = arith.constant dense<0.000000e+00> : vector<2x128xf32>
    %280 = tpu.matmul %279, %178, %cst_69 {dimension_numbers = #tpu.dot_dimension_numbers<[1], [0], [0], [1], [0, 0, 1, 1], [], []>} : vector<2x32xbf16>, vector<32x128xbf16>, vector<2x128xf32> -> vector<2x128xf32>
    %281 = vector.broadcast %180 : vector<1x128xf32> to vector<2x128xf32>
    %282 = arith.addf %280, %281 : vector<2x128xf32>
    %283 = arith.truncf %278 : vector<2x32xf32> to vector<2x32xbf16>
    %cst_70 = arith.constant dense<0.000000e+00> : vector<2x128xf32>
    %284 = tpu.matmul %283, %179, %cst_70 {dimension_numbers = #tpu.dot_dimension_numbers<[1], [0], [0], [1], [0, 0, 1, 1], [], []>} : vector<2x32xbf16>, vector<32x128xbf16>, vector<2x128xf32> -> vector<2x128xf32>
    %285 = arith.addf %282, %284 : vector<2x128xf32>
    %cst_71 = arith.constant 5.000000e-01 : f32
    %286 = vector.broadcast %cst_71 : f32 to vector<2x128xf32>
    %287 = arith.mulf %286, %285 : vector<2x128xf32>
    %288 = math.tanh %287 : vector<2x128xf32>
    %cst_72 = arith.constant 5.000000e-01 : f32
    %289 = vector.broadcast %cst_72 : f32 to vector<2x128xf32>
    %290 = arith.mulf %289, %288 : vector<2x128xf32>
    %cst_73 = arith.constant 5.000000e-01 : f32
    %291 = vector.broadcast %cst_73 : f32 to vector<2x128xf32>
    %292 = arith.addf %290, %291 : vector<2x128xf32>
    %293 = math.tanh %285 : vector<2x128xf32>
    %294 = vector.extract_strided_slice %292 {offsets = [0, 0], sizes = [2, 32], strides = [1, 1]} : vector<2x128xf32> to vector<2x32xf32>
    %295 = vector.extract_strided_slice %292 {offsets = [0, 32], sizes = [2, 32], strides = [1, 1]} : vector<2x128xf32> to vector<2x32xf32>
    %296 = vector.extract_strided_slice %293 {offsets = [0, 64], sizes = [2, 32], strides = [1, 1]} : vector<2x128xf32> to vector<2x32xf32>
    %297 = vector.extract_strided_slice %292 {offsets = [0, 96], sizes = [2, 32], strides = [1, 1]} : vector<2x128xf32> to vector<2x32xf32>
    %298 = arith.mulf %295, %276 : vector<2x32xf32>
    %299 = arith.mulf %294, %296 : vector<2x32xf32>
    %300 = arith.addf %298, %299 : vector<2x32xf32>
    %301 = math.tanh %300 : vector<2x32xf32>
    %302 = arith.mulf %297, %301 : vector<2x32xf32>
    %303 = arith.truncf %135 : vector<2x32xf32> to vector<2x32xbf16>
    %cst_74 = arith.constant dense<0.000000e+00> : vector<2x128xf32>
    %304 = tpu.matmul %303, %178, %cst_74 {dimension_numbers = #tpu.dot_dimension_numbers<[1], [0], [0], [1], [0, 0, 1, 1], [], []>} : vector<2x32xbf16>, vector<32x128xbf16>, vector<2x128xf32> -> vector<2x128xf32>
    %305 = vector.broadcast %180 : vector<1x128xf32> to vector<2x128xf32>
    %306 = arith.addf %304, %305 : vector<2x128xf32>
    %307 = arith.truncf %302 : vector<2x32xf32> to vector<2x32xbf16>
    %cst_75 = arith.constant dense<0.000000e+00> : vector<2x128xf32>
    %308 = tpu.matmul %307, %179, %cst_75 {dimension_numbers = #tpu.dot_dimension_numbers<[1], [0], [0], [1], [0, 0, 1, 1], [], []>} : vector<2x32xbf16>, vector<32x128xbf16>, vector<2x128xf32> -> vector<2x128xf32>
    %309 = arith.addf %306, %308 : vector<2x128xf32>
    %cst_76 = arith.constant 5.000000e-01 : f32
    %310 = vector.broadcast %cst_76 : f32 to vector<2x128xf32>
    %311 = arith.mulf %310, %309 : vector<2x128xf32>
    %312 = math.tanh %311 : vector<2x128xf32>
    %cst_77 = arith.constant 5.000000e-01 : f32
    %313 = vector.broadcast %cst_77 : f32 to vector<2x128xf32>
    %314 = arith.mulf %313, %312 : vector<2x128xf32>
    %cst_78 = arith.constant 5.000000e-01 : f32
    %315 = vector.broadcast %cst_78 : f32 to vector<2x128xf32>
    %316 = arith.addf %314, %315 : vector<2x128xf32>
    %317 = math.tanh %309 : vector<2x128xf32>
    %318 = vector.extract_strided_slice %316 {offsets = [0, 0], sizes = [2, 32], strides = [1, 1]} : vector<2x128xf32> to vector<2x32xf32>
    %319 = vector.extract_strided_slice %316 {offsets = [0, 32], sizes = [2, 32], strides = [1, 1]} : vector<2x128xf32> to vector<2x32xf32>
    %320 = vector.extract_strided_slice %317 {offsets = [0, 64], sizes = [2, 32], strides = [1, 1]} : vector<2x128xf32> to vector<2x32xf32>
    %321 = vector.extract_strided_slice %316 {offsets = [0, 96], sizes = [2, 32], strides = [1, 1]} : vector<2x128xf32> to vector<2x32xf32>
    %322 = arith.mulf %319, %300 : vector<2x32xf32>
    %323 = arith.mulf %318, %320 : vector<2x32xf32>
    %324 = arith.addf %322, %323 : vector<2x32xf32>
    %325 = math.tanh %324 : vector<2x32xf32>
    %326 = arith.mulf %321, %325 : vector<2x32xf32>
    %327 = arith.truncf %156 : vector<2x32xf32> to vector<2x32xbf16>
    %cst_79 = arith.constant dense<0.000000e+00> : vector<2x128xf32>
    %328 = tpu.matmul %327, %178, %cst_79 {dimension_numbers = #tpu.dot_dimension_numbers<[1], [0], [0], [1], [0, 0, 1, 1], [], []>} : vector<2x32xbf16>, vector<32x128xbf16>, vector<2x128xf32> -> vector<2x128xf32>
    %329 = vector.broadcast %180 : vector<1x128xf32> to vector<2x128xf32>
    %330 = arith.addf %328, %329 : vector<2x128xf32>
    %331 = arith.truncf %326 : vector<2x32xf32> to vector<2x32xbf16>
    %cst_80 = arith.constant dense<0.000000e+00> : vector<2x128xf32>
    %332 = tpu.matmul %331, %179, %cst_80 {dimension_numbers = #tpu.dot_dimension_numbers<[1], [0], [0], [1], [0, 0, 1, 1], [], []>} : vector<2x32xbf16>, vector<32x128xbf16>, vector<2x128xf32> -> vector<2x128xf32>
    %333 = arith.addf %330, %332 : vector<2x128xf32>
    %cst_81 = arith.constant 5.000000e-01 : f32
    %334 = vector.broadcast %cst_81 : f32 to vector<2x128xf32>
    %335 = arith.mulf %334, %333 : vector<2x128xf32>
    %336 = math.tanh %335 : vector<2x128xf32>
    %cst_82 = arith.constant 5.000000e-01 : f32
    %337 = vector.broadcast %cst_82 : f32 to vector<2x128xf32>
    %338 = arith.mulf %337, %336 : vector<2x128xf32>
    %cst_83 = arith.constant 5.000000e-01 : f32
    %339 = vector.broadcast %cst_83 : f32 to vector<2x128xf32>
    %340 = arith.addf %338, %339 : vector<2x128xf32>
    %341 = math.tanh %333 : vector<2x128xf32>
    %342 = vector.extract_strided_slice %340 {offsets = [0, 0], sizes = [2, 32], strides = [1, 1]} : vector<2x128xf32> to vector<2x32xf32>
    %343 = vector.extract_strided_slice %340 {offsets = [0, 32], sizes = [2, 32], strides = [1, 1]} : vector<2x128xf32> to vector<2x32xf32>
    %344 = vector.extract_strided_slice %341 {offsets = [0, 64], sizes = [2, 32], strides = [1, 1]} : vector<2x128xf32> to vector<2x32xf32>
    %345 = vector.extract_strided_slice %340 {offsets = [0, 96], sizes = [2, 32], strides = [1, 1]} : vector<2x128xf32> to vector<2x32xf32>
    %346 = arith.mulf %343, %324 : vector<2x32xf32>
    %347 = arith.mulf %342, %344 : vector<2x32xf32>
    %348 = arith.addf %346, %347 : vector<2x32xf32>
    %349 = math.tanh %348 : vector<2x32xf32>
    %350 = arith.mulf %345, %349 : vector<2x32xf32>
    %351 = arith.truncf %177 : vector<2x32xf32> to vector<2x32xbf16>
    %cst_84 = arith.constant dense<0.000000e+00> : vector<2x128xf32>
    %352 = tpu.matmul %351, %178, %cst_84 {dimension_numbers = #tpu.dot_dimension_numbers<[1], [0], [0], [1], [0, 0, 1, 1], [], []>} : vector<2x32xbf16>, vector<32x128xbf16>, vector<2x128xf32> -> vector<2x128xf32>
    %353 = vector.broadcast %180 : vector<1x128xf32> to vector<2x128xf32>
    %354 = arith.addf %352, %353 : vector<2x128xf32>
    %355 = arith.truncf %350 : vector<2x32xf32> to vector<2x32xbf16>
    %cst_85 = arith.constant dense<0.000000e+00> : vector<2x128xf32>
    %356 = tpu.matmul %355, %179, %cst_85 {dimension_numbers = #tpu.dot_dimension_numbers<[1], [0], [0], [1], [0, 0, 1, 1], [], []>} : vector<2x32xbf16>, vector<32x128xbf16>, vector<2x128xf32> -> vector<2x128xf32>
    %357 = arith.addf %354, %356 : vector<2x128xf32>
    %cst_86 = arith.constant 5.000000e-01 : f32
    %358 = vector.broadcast %cst_86 : f32 to vector<2x128xf32>
    %359 = arith.mulf %358, %357 : vector<2x128xf32>
    %360 = math.tanh %359 : vector<2x128xf32>
    %cst_87 = arith.constant 5.000000e-01 : f32
    %361 = vector.broadcast %cst_87 : f32 to vector<2x128xf32>
    %362 = arith.mulf %361, %360 : vector<2x128xf32>
    %cst_88 = arith.constant 5.000000e-01 : f32
    %363 = vector.broadcast %cst_88 : f32 to vector<2x128xf32>
    %364 = arith.addf %362, %363 : vector<2x128xf32>
    %365 = math.tanh %357 : vector<2x128xf32>
    %366 = vector.extract_strided_slice %364 {offsets = [0, 0], sizes = [2, 32], strides = [1, 1]} : vector<2x128xf32> to vector<2x32xf32>
    %367 = vector.extract_strided_slice %364 {offsets = [0, 32], sizes = [2, 32], strides = [1, 1]} : vector<2x128xf32> to vector<2x32xf32>
    %368 = vector.extract_strided_slice %365 {offsets = [0, 64], sizes = [2, 32], strides = [1, 1]} : vector<2x128xf32> to vector<2x32xf32>
    %369 = vector.extract_strided_slice %364 {offsets = [0, 96], sizes = [2, 32], strides = [1, 1]} : vector<2x128xf32> to vector<2x32xf32>
    %370 = arith.mulf %367, %348 : vector<2x32xf32>
    %371 = arith.mulf %366, %368 : vector<2x32xf32>
    %372 = arith.addf %370, %371 : vector<2x32xf32>
    %373 = math.tanh %372 : vector<2x32xf32>
    %374 = arith.mulf %369, %373 : vector<2x32xf32>
    %375 = tpu.concatenate %177, %374 in 0 : vector<2x32xf32>, vector<2x32xf32> -> vector<4x32xf32>
    %376 = arith.truncf %375 : vector<4x32xf32> to vector<4x32xbf16>
    %c0_89 = arith.constant 0 : index
    %c0_90 = arith.constant 0 : index
    %377 = vector.load %arg7[%c0_89, %c0_90] : memref<32x128xbf16, #tpu.memory_space<vmem>>, vector<32x128xbf16>
    %cst_91 = arith.constant dense<0.000000e+00> : vector<4x128xf32>
    %378 = tpu.matmul %376, %377, %cst_91 {dimension_numbers = #tpu.dot_dimension_numbers<[1], [0], [0], [1], [0, 0, 1, 1], [], []>} : vector<4x32xbf16>, vector<32x128xbf16>, vector<4x128xf32> -> vector<4x128xf32>
    %c0_92 = arith.constant 0 : index
    %c0_93 = arith.constant 0 : index
    %379 = vector.load %arg8[%c0_92, %c0_93] : memref<1x128xf32, #tpu.memory_space<vmem>>, vector<1x128xf32>
    %380 = vector.broadcast %379 : vector<1x128xf32> to vector<4x128xf32>
    %381 = arith.addf %378, %380 : vector<4x128xf32>
    %cst_94 = arith.constant 0.000000e+00 : f32
    %382 = vector.broadcast %cst_94 : f32 to vector<4x128xf32>
    %383 = arith.maximumf %381, %382 : vector<4x128xf32>
    %c0_95 = arith.constant 0 : index
    %c0_96 = arith.constant 0 : index
    %384 = vector.load %arg9[%c0_95, %c0_96] : memref<4x128xf32, #tpu.memory_space<vmem>>, vector<4x128xf32>
    tpu.vector_store %arg9[%c0_95, %c0_96], %383 {strides = array<i32>} : memref<4x128xf32, #tpu.memory_space<vmem>>, vector<4x128xf32>,
    return
  }
}

</mosaic_0001>

<llo_original>
// kernel: lstm_forward.1
$region0: #{lstm_forward.1}
  #allocation0 [shape = 'u32[]', space=smem, size = 0x4, offset = 0x4, fixed_abs, tag = 'smem constant byte address 0x4 - core index']
  #allocation1 [shape = 'u32[144,128]{1,0:T(1,128)}', space=vmem, size = 0x12000, scoped, tag = 'internal scratch']
  %s0 = inlined_call_operand.vmem [shape: f32[16,4], index: 0, kind: input, shape index: {}]
  %s1 = inlined_call_operand.vmem [shape: bf16[4,128], index: 1, kind: input, shape index: {}]
  %s2 = inlined_call_operand.vmem [shape: bf16[32,128], index: 2, kind: input, shape index: {}]
  %s3 = inlined_call_operand.vmem [shape: f32[1,128], index: 3, kind: input, shape index: {}]
  %s4 = inlined_call_operand.vmem [shape: bf16[32,128], index: 4, kind: input, shape index: {}]
  %s5 = inlined_call_operand.vmem [shape: bf16[32,128], index: 5, kind: input, shape index: {}]
  %s6 = inlined_call_operand.vmem [shape: f32[1,128], index: 6, kind: input, shape index: {}]
  %s7 = inlined_call_operand.vmem [shape: bf16[32,128], index: 7, kind: input, shape index: {}]
  %s8 = inlined_call_operand.vmem [shape: f32[1,128], index: 8, kind: input, shape index: {}]
  %s9 = inlined_call_operand.vmem [shape: f32[4,128], index: 9, kind: output, shape index: {}]
  %s10 = sld [smem:[#allocation0]]
  $region46: #{lstm_forward.1} parent=0
    _
  %s12 = ssub.s32 1, %s10
  %s13 = scalar_select 0, %s12, %s10
  // Predicated region
  $region2: #{lstm_forward.1} parent=0 // pred_check
    _
  $region3: #{lstm_forward.1} parent=0 // pred_check_branch
    %15 = sbr.rel (0) target = $region5
  $region4: #{lstm_forward.1} parent=0 // pred_region
    _
  $region5: #{lstm_forward.1} parent=0 // pred_fallthru
    _
  // Predicated region
  $region6: #{lstm_forward.1} parent=0 // pred_check
    _
  $region7: #{lstm_forward.1} parent=0 // pred_check_branch
    %17 = sbr.rel (0) target = $region9
  $region8: #{lstm_forward.1} parent=0 // pred_region
    _
  $region9: #{lstm_forward.1} parent=0 // pred_fallthru
    _
  // Predicated region
  $region10: #{lstm_forward.1} parent=0 // pred_check
    _
  $region11: #{lstm_forward.1} parent=0 // pred_check_branch
    %19 = sbr.rel (0) target = $region13
  $region12: #{lstm_forward.1} parent=0 // pred_region
    _
  $region13: #{lstm_forward.1} parent=0 // pred_fallthru
    _
  // Predicated region
  $region14: #{lstm_forward.1} parent=0 // pred_check
    _
  $region15: #{lstm_forward.1} parent=0 // pred_check_branch
    %21 = sbr.rel (0) target = $region17
  $region16: #{lstm_forward.1} parent=0 // pred_region
    _
  $region17: #{lstm_forward.1} parent=0 // pred_fallthru
    _
  // Predicated region
  $region18: #{lstm_forward.1} parent=0 // pred_check
    _
  $region19: #{lstm_forward.1} parent=0 // pred_check_branch
    %23 = sbr.rel (0) target = $region21
  $region20: #{lstm_forward.1} parent=0 // pred_region
    _
  $region21: #{lstm_forward.1} parent=0 // pred_fallthru
    _
  // Predicated region
  $region22: #{lstm_forward.1} parent=0 // pred_check
    _
  $region23: #{lstm_forward.1} parent=0 // pred_check_branch
    %25 = sbr.rel (0) target = $region25
  $region24: #{lstm_forward.1} parent=0 // pred_region
    _
  $region25: #{lstm_forward.1} parent=0 // pred_fallthru
    _
  // Predicated region
  $region26: #{lstm_forward.1} parent=0 // pred_check
    _
  $region27: #{lstm_forward.1} parent=0 // pred_check_branch
    %27 = sbr.rel (0) target = $region29
  $region28: #{lstm_forward.1} parent=0 // pred_region
    _
  $region29: #{lstm_forward.1} parent=0 // pred_fallthru
    _
  // Predicated region
  $region30: #{lstm_forward.1} parent=0 // pred_check
    _
  $region31: #{lstm_forward.1} parent=0 // pred_check_branch
    %29 = sbr.rel (0) target = $region33
  $region32: #{lstm_forward.1} parent=0 // pred_region
    _
  $region33: #{lstm_forward.1} parent=0 // pred_fallthru
    _
  // Predicated region
  $region34: #{lstm_forward.1} parent=0 // pred_check
    _
  $region35: #{lstm_forward.1} parent=0 // pred_check_branch
    %31 = sbr.rel (0) target = $region37
  $region36: #{lstm_forward.1} parent=0 // pred_region
    _
  $region37: #{lstm_forward.1} parent=0 // pred_fallthru
    _
  %v33 = vld [vmem:[%s0] sm:$0xff]
  %v34 = vld [vmem:[%s0 + $0x8] sm:$0xff]
  %v35 = vpack.c.bf16 %v34, %v33
  %v36 = vld [vmem:[%s1] sm:$0x3]
  %v37 = vld [vmem:[%s2] sm:$0xf]
  %v38 = vld [vmem:[%s2 + $0x4] sm:$0xf]
  %v39 = vld [vmem:[%s2 + $0x8] sm:$0xf]
  %v40 = vld [vmem:[%s2 + $0xc] sm:$0xf]
  %v41 = vld [vmem:[%s3] sm:$0x1]
  %v43 = vlaneseq
  %v44 = vshrl.u32 %v43, 7
  %v45 = vsub.s32 0, %v44
  %v46 = vrot.slane %v41, %v45
  %vm48 = vcmask 31744
  %v50 = vsel %vm48, %v35, 0
  %vm52 = vcmask 1041408
  %v54 = vsel %vm52, %v36, 0
  %56 = vmatprep.subr.bf16.mxu0 0
  %57 = vmatpush1.bf16.msra.mxu0 %v54
  %58 = vmatprep.subr.bf16.mxu0 0
  %59 = vmatpush1.bf16.msra.mxu0 0
  %60 = vmatprep.subr.bf16.mxu0 0
  %61 = vmatpush1.bf16.msra.mxu0 0
  %62 = vmatprep.subr.bf16.mxu0 0
  %63 = vmatpush1.bf16.msra.mxu0 0
  %64 = vmatprep.subr.bf16.mxu0 0
  %65 = vmatpush1.bf16.msra.mxu0 0
  %66 = vmatprep.subr.bf16.mxu0 0
  %67 = vmatpush1.bf16.msra.mxu0 0
  %68 = vmatprep.subr.bf16.mxu0 0
  %69 = vmatpush1.bf16.msra.mxu0 0
  %70 = vmatprep.subr.bf16.mxu0 0
  %71 = vmatpush1.bf16.msra.mxu0 0
  %72 = vmatprep.subr.bf16.mxu0 0
  %73 = vmatpush1.bf16.msra.mxu0 0
  %74 = vmatprep.subr.bf16.mxu0 0
  %75 = vmatpush1.bf16.msra.mxu0 0
  %76 = vmatprep.subr.bf16.mxu0 0
  %77 = vmatpush1.bf16.msra.mxu0 0
  %78 = vmatprep.subr.bf16.mxu0 0
  %79 = vmatpush1.bf16.msra.mxu0 0
  %80 = vmatprep.subr.bf16.mxu0 0
  %81 = vmatpush1.bf16.msra.mxu0 0
  %82 = vmatprep.subr.bf16.mxu0 0
  %83 = vmatpush1.bf16.msra.mxu0 0
  %84 = vmatprep.subr.bf16.mxu0 0
  %85 = vmatpush1.bf16.msra.mxu0 0
  %86 = vmatprep.subr.bf16.mxu0 0
  %87 = vmatpush1.bf16.msra.mxu0 0
  %88 = vmatprep.mubr.bf16.mxu0 0
  %89 = vmatmul.mubr.bf16.gmra.mrb[0].mxu0 %v50
  %v90 = vpop.f32.mrb[0].mxu0
  %v91 = vadd.f32 %v46, %v90
  %v92 = vpop.f32.mrb[0].mxu0
  %v93 = vpop.f32.mrb[0].mxu0
  %v94 = vadd.f32 %v46, %v93
  %v95 = vpop.f32.mrb[0].mxu0
  %96 = vdwg.mxu0
  %v101 = vunpack.c.l.b16 %v37
  %v102 = vunpack.c.l.b16 %v38
  %v103 = vunpack.c.l.b16 %v39
  %v104 = vunpack.c.l.b16 %v40
  %v105 = vpack.c.b16 %v102, %v101
  %v106 = vpack.c.b16 %v104, %v103
  %vm109 = vcmask 261120
  %v111 = vsel %vm109, 0, 0
  %113 = vmatprep.subr.bf16.mxu0 0
  %114 = vmatpush1.bf16.msra.mxu0 %v105
  %115 = vmatprep.subr.bf16.mxu0 0
  %116 = vmatpush1.bf16.msra.mxu0 %v106
  %117 = vmatprep.subr.bf16.mxu0 0
  %118 = vmatpush1.bf16.msra.mxu0 0
  %119 = vmatprep.subr.bf16.mxu0 0
  %120 = vmatpush1.bf16.msra.mxu0 0
  %121 = vmatprep.subr.bf16.mxu0 0
  %122 = vmatpush1.bf16.msra.mxu0 0
  %123 = vmatprep.subr.bf16.mxu0 0
  %124 = vmatpush1.bf16.msra.mxu0 0
  %125 = vmatprep.subr.bf16.mxu0 0
  %126 = vmatpush1.bf16.msra.mxu0 0
  %127 = vmatprep.subr.bf16.mxu0 0
  %128 = vmatpush1.bf16.msra.mxu0 0
  %129 = vmatprep.subr.bf16.mxu0 0
  %130 = vmatpush1.bf16.msra.mxu0 0
  %131 = vmatprep.subr.bf16.mxu0 0
  %132 = vmatpush1.bf16.msra.mxu0 0
  %133 = vmatprep.subr.bf16.mxu0 0
  %134 = vmatpush1.bf16.msra.mxu0 0
  %135 = vmatprep.subr.bf16.mxu0 0
  %136 = vmatpush1.bf16.msra.mxu0 0
  %137 = vmatprep.subr.bf16.mxu0 0
  %138 = vmatpush1.bf16.msra.mxu0 0
  %139 = vmatprep.subr.bf16.mxu0 0
  %140 = vmatpush1.bf16.msra.mxu0 0
  %141 = vmatprep.subr.bf16.mxu0 0
  %142 = vmatpush1.bf16.msra.mxu0 0
  %143 = vmatprep.subr.bf16.mxu0 0
  %144 = vmatpush1.bf16.msra.mxu0 0
  %145 = vmatprep.mubr.bf16.mxu0 0
  %146 = vmatmul.mubr.bf16.gmra.mrb[0].mxu0 %v111
  %v147 = vpop.f32.mrb[0].mxu0
  %v148 = vadd.f32 0.0, %v147
  %v149 = vpop.f32.mrb[0].mxu0
  %v150 = vpop.f32.mrb[0].mxu0
  %v151 = vpop.f32.mrb[0].mxu0
  %152 = vdwg.mxu0
  %v153 = vadd.f32 %v91, %v148
  %v154 = vmul.f32 %v153, 0.5
  %v155 = vtanh.pop %v154
  %v156 = vmul.f32 %v155, 0.5
  %v157 = vadd.f32 %v156, 0.5
  %v158 = vtanh.pop %v153
  %v159 = vmul.f32 %v157, 0.0
  %161 = vrot.lane.b32.xlu0 %v158, 64
  %v162 = vpop.permute.xlu0 %161
  %v164 = vmul.f32 %v157, %v162
  %166 = vrot.lane.b32.xlu0 %v164, 32
  %v167 = vpop.permute.xlu0 %166
  %v169 = vadd.f32 %v159, %v167
  %v170 = vtanh.pop %v169
  %172 = vrot.lane.b32.xlu0 %v170, 64
  %v173 = vpop.permute.xlu0 %172
  %v175 = vmul.f32 %v157, %v173
  %v176 = vpack.c.bf16 %v175, %v175
  %178 = vrot.lane.b32.xlu0 %v176, 32
  %v179 = vpop.permute.xlu0 %178
  %v181 = vsel %vm109, %v179, 0
  %183 = vmatprep.subr.bf16.mxu0 0
  %184 = vmatpush1.bf16.msra.mxu0 %v105
  %185 = vmatprep.subr.bf16.mxu0 0
  %186 = vmatpush1.bf16.msra.mxu0 %v106
  %187 = vmatprep.subr.bf16.mxu0 0
  %188 = vmatpush1.bf16.msra.mxu0 0
  %189 = vmatprep.subr.bf16.mxu0 0
  %190 = vmatpush1.bf16.msra.mxu0 0
  %191 = vmatprep.subr.bf16.mxu0 0
  %192 = vmatpush1.bf16.msra.mxu0 0
  %193 = vmatprep.subr.bf16.mxu0 0
  %194 = vmatpush1.bf16.msra.mxu0 0
  %195 = vmatprep.subr.bf16.mxu0 0
  %196 = vmatpush1.bf16.msra.mxu0 0
  %197 = vmatprep.subr.bf16.mxu0 0
  %198 = vmatpush1.bf16.msra.mxu0 0
  %199 = vmatprep.subr.bf16.mxu0 0
  %200 = vmatpush1.bf16.msra.mxu0 0
  %201 = vmatprep.subr.bf16.mxu0 0
  %202 = vmatpush1.bf16.msra.mxu0 0
  %203 = vmatprep.subr.bf16.mxu0 0
  %204 = vmatpush1.bf16.msra.mxu0 0
  %205 = vmatprep.subr.bf16.mxu0 0
  %206 = vmatpush1.bf16.msra.mxu0 0
  %207 = vmatprep.subr.bf16.mxu0 0
  %208 = vmatpush1.bf16.msra.mxu0 0
  %209 = vmatprep.subr.bf16.mxu0 0
  %210 = vmatpush1.bf16.msra.mxu0 0
  %211 = vmatprep.subr.bf16.mxu0 0
  %212 = vmatpush1.bf16.msra.mxu0 0
  %213 = vmatprep.subr.bf16.mxu0 0
  %214 = vmatpush1.bf16.msra.mxu0 0
  %215 = vmatprep.mubr.bf16.mxu0 0
  %216 = vmatmul.mubr.bf16.gmra.mrb[0].mxu0 %v181
  %v217 = vpop.f32.mrb[0].mxu0
  %v218 = vadd.f32 0.0, %v217
  %v219 = vpop.f32.mrb[0].mxu0
  %v220 = vpop.f32.mrb[0].mxu0
  %v221 = vpop.f32.mrb[0].mxu0
  %222 = vdwg.mxu0
  %v224 = vrot.slane %v218, 6
  %v226 = vadd.f32 %v91, %v224
  %v227 = vmul.f32 %v226, 0.5
  %v228 = vtanh.pop %v227
  %v229 = vmul.f32 %v228, 0.5
  %v230 = vadd.f32 %v229, 0.5
  %v231 = vtanh.pop %v226
  %v233 = vrot.slane %v169, 6
  %v235 = vmul.f32 %v230, %v233
  %237 = vrot.lane.b32.xlu0 %v231, 64
  %v238 = vpop.permute.xlu0 %237
  %v240 = vmul.f32 %v230, %v238
  %242 = vrot.lane.b32.xlu0 %v240, 32
  %v243 = vpop.permute.xlu0 %242
  %v245 = vadd.f32 %v235, %v243
  %v246 = vtanh.pop %v245
  %248 = vrot.lane.b32.xlu0 %v246, 64
  %v249 = vpop.permute.xlu0 %248
  %v251 = vmul.f32 %v230, %v249
  %v252 = vpack.c.bf16 %v251, %v251
  %v254 = vrot.slane %v252, 1
  %255 = vrot.lane.b32.xlu0 %v254, 32
  %v256 = vpop.permute.xlu0 %255
  %v258 = vsel %vm109, %v256, 0
  %260 = vmatprep.subr.bf16.mxu0 0
  %261 = vmatpush1.bf16.msra.mxu0 %v105
  %262 = vmatprep.subr.bf16.mxu0 0
  %263 = vmatpush1.bf16.msra.mxu0 %v106
  %264 = vmatprep.subr.bf16.mxu0 0
  %265 = vmatpush1.bf16.msra.mxu0 0
  %266 = vmatprep.subr.bf16.mxu0 0
  %267 = vmatpush1.bf16.msra.mxu0 0
  %268 = vmatprep.subr.bf16.mxu0 0
  %269 = vmatpush1.bf16.msra.mxu0 0
  %270 = vmatprep.subr.bf16.mxu0 0
  %271 = vmatpush1.bf16.msra.mxu0 0
  %272 = vmatprep.subr.bf16.mxu0 0
  %273 = vmatpush1.bf16.msra.mxu0 0
  %274 = vmatprep.subr.bf16.mxu0 0
  %275 = vmatpush1.bf16.msra.mxu0 0
  %276 = vmatprep.subr.bf16.mxu0 0
  %277 = vmatpush1.bf16.msra.mxu0 0
  %278 = vmatprep.subr.bf16.mxu0 0
  %279 = vmatpush1.bf16.msra.mxu0 0
  %280 = vmatprep.subr.bf16.mxu0 0
  %281 = vmatpush1.bf16.msra.mxu0 0
  %282 = vmatprep.subr.bf16.mxu0 0
  %283 = vmatpush1.bf16.msra.mxu0 0
  %284 = vmatprep.subr.bf16.mxu0 0
  %285 = vmatpush1.bf16.msra.mxu0 0
  %286 = vmatprep.subr.bf16.mxu0 0
  %287 = vmatpush1.bf16.msra.mxu0 0
  %288 = vmatprep.subr.bf16.mxu0 0
  %289 = vmatpush1.bf16.msra.mxu0 0
  %290 = vmatprep.subr.bf16.mxu0 0
  %291 = vmatpush1.bf16.msra.mxu0 0
  %292 = vmatprep.mubr.bf16.mxu0 0
  %293 = vmatmul.mubr.bf16.gmra.mrb[0].mxu0 %v258
  %v294 = vpop.f32.mrb[0].mxu0
  %v295 = vadd.f32 0.0, %v294
  %v296 = vpop.f32.mrb[0].mxu0
  %v297 = vpop.f32.mrb[0].mxu0
  %v298 = vpop.f32.mrb[0].mxu0
  %299 = vdwg.mxu0
  %v301 = vrot.slane %v295, 4
  %v303 = vadd.f32 %v91, %v301
  %v304 = vmul.f32 %v303, 0.5
  %v305 = vtanh.pop %v304
  %v306 = vmul.f32 %v305, 0.5
  %v307 = vadd.f32 %v306, 0.5
  %v308 = vtanh.pop %v303
  %v310 = vrot.slane %v245, 6
  %v312 = vmul.f32 %v307, %v310
  %314 = vrot.lane.b32.xlu0 %v308, 64
  %v315 = vpop.permute.xlu0 %314
  %v317 = vmul.f32 %v307, %v315
  %319 = vrot.lane.b32.xlu0 %v317, 32
  %v320 = vpop.permute.xlu0 %319
  %v322 = vadd.f32 %v312, %v320
  %v323 = vtanh.pop %v322
  %325 = vrot.lane.b32.xlu0 %v323, 64
  %v326 = vpop.permute.xlu0 %325
  %v328 = vmul.f32 %v307, %v326
  %v329 = vpack.c.bf16 %v328, %v328
  %v331 = vrot.slane %v329, 2
  %332 = vrot.lane.b32.xlu0 %v331, 32
  %v333 = vpop.permute.xlu0 %332
  %v335 = vsel %vm109, %v333, 0
  %337 = vmatprep.subr.bf16.mxu0 0
  %338 = vmatpush1.bf16.msra.mxu0 %v105
  %339 = vmatprep.subr.bf16.mxu0 0
  %340 = vmatpush1.bf16.msra.mxu0 %v106
  %341 = vmatprep.subr.bf16.mxu0 0
  %342 = vmatpush1.bf16.msra.mxu0 0
  %343 = vmatprep.subr.bf16.mxu0 0
  %344 = vmatpush1.bf16.msra.mxu0 0
  %345 = vmatprep.subr.bf16.mxu0 0
  %346 = vmatpush1.bf16.msra.mxu0 0
  %347 = vmatprep.subr.bf16.mxu0 0
  %348 = vmatpush1.bf16.msra.mxu0 0
  %349 = vmatprep.subr.bf16.mxu0 0
  %350 = vmatpush1.bf16.msra.mxu0 0
  %351 = vmatprep.subr.bf16.mxu0 0
  %352 = vmatpush1.bf16.msra.mxu0 0
  %353 = vmatprep.subr.bf16.mxu0 0
  %354 = vmatpush1.bf16.msra.mxu0 0
  %355 = vmatprep.subr.bf16.mxu0 0
  %356 = vmatpush1.bf16.msra.mxu0 0
  %357 = vmatprep.subr.bf16.mxu0 0
  %358 = vmatpush1.bf16.msra.mxu0 0
  %359 = vmatprep.subr.bf16.mxu0 0
  %360 = vmatpush1.bf16.msra.mxu0 0
  %361 = vmatprep.subr.bf16.mxu0 0
  %362 = vmatpush1.bf16.msra.mxu0 0
  %363 = vmatprep.subr.bf16.mxu0 0
  %364 = vmatpush1.bf16.msra.mxu0 0
  %365 = vmatprep.subr.bf16.mxu0 0
  %366 = vmatpush1.bf16.msra.mxu0 0
  %367 = vmatprep.subr.bf16.mxu0 0
  %368 = vmatpush1.bf16.msra.mxu0 0
  %369 = vmatprep.mubr.bf16.mxu0 0
  %370 = vmatmul.mubr.bf16.gmra.mrb[0].mxu0 %v335
  %v371 = vpop.f32.mrb[0].mxu0
  %v372 = vadd.f32 0.0, %v371
  %v373 = vpop.f32.mrb[0].mxu0
  %v374 = vpop.f32.mrb[0].mxu0
  %v375 = vpop.f32.mrb[0].mxu0
  %376 = vdwg.mxu0
  %v378 = vrot.slane %v372, 2
  %v380 = vadd.f32 %v91, %v378
  %v381 = vmul.f32 %v380, 0.5
  %v382 = vtanh.pop %v381
  %v383 = vmul.f32 %v382, 0.5
  %v384 = vadd.f32 %v383, 0.5
  %v385 = vtanh.pop %v380
  %v387 = vrot.slane %v322, 6
  %v389 = vmul.f32 %v384, %v387
  %391 = vrot.lane.b32.xlu0 %v385, 64
  %v392 = vpop.permute.xlu0 %391
  %v394 = vmul.f32 %v384, %v392
  %396 = vrot.lane.b32.xlu0 %v394, 32
  %v397 = vpop.permute.xlu0 %396
  %v399 = vadd.f32 %v389, %v397
  %v400 = vtanh.pop %v399
  %402 = vrot.lane.b32.xlu0 %v400, 64
  %v403 = vpop.permute.xlu0 %402
  %v405 = vmul.f32 %v384, %v403
  %v406 = vpack.c.bf16 %v405, %v405
  %v408 = vrot.slane %v406, 3
  %409 = vrot.lane.b32.xlu0 %v408, 32
  %v410 = vpop.permute.xlu0 %409
  %v412 = vsel %vm109, %v410, 0
  %414 = vmatprep.subr.bf16.mxu0 0
  %415 = vmatpush1.bf16.msra.mxu0 %v105
  %416 = vmatprep.subr.bf16.mxu0 0
  %417 = vmatpush1.bf16.msra.mxu0 %v106
  %418 = vmatprep.subr.bf16.mxu0 0
  %419 = vmatpush1.bf16.msra.mxu0 0
  %420 = vmatprep.subr.bf16.mxu0 0
  %421 = vmatpush1.bf16.msra.mxu0 0
  %422 = vmatprep.subr.bf16.mxu0 0
  %423 = vmatpush1.bf16.msra.mxu0 0
  %424 = vmatprep.subr.bf16.mxu0 0
  %425 = vmatpush1.bf16.msra.mxu0 0
  %426 = vmatprep.subr.bf16.mxu0 0
  %427 = vmatpush1.bf16.msra.mxu0 0
  %428 = vmatprep.subr.bf16.mxu0 0
  %429 = vmatpush1.bf16.msra.mxu0 0
  %430 = vmatprep.subr.bf16.mxu0 0
  %431 = vmatpush1.bf16.msra.mxu0 0
  %432 = vmatprep.subr.bf16.mxu0 0
  %433 = vmatpush1.bf16.msra.mxu0 0
  %434 = vmatprep.subr.bf16.mxu0 0
  %435 = vmatpush1.bf16.msra.mxu0 0
  %436 = vmatprep.subr.bf16.mxu0 0
  %437 = vmatpush1.bf16.msra.mxu0 0
  %438 = vmatprep.subr.bf16.mxu0 0
  %439 = vmatpush1.bf16.msra.mxu0 0
  %440 = vmatprep.subr.bf16.mxu0 0
  %441 = vmatpush1.bf16.msra.mxu0 0
  %442 = vmatprep.subr.bf16.mxu0 0
  %443 = vmatpush1.bf16.msra.mxu0 0
  %444 = vmatprep.subr.bf16.mxu0 0
  %445 = vmatpush1.bf16.msra.mxu0 0
  %446 = vmatprep.mubr.bf16.mxu0 0
  %447 = vmatmul.mubr.bf16.gmra.mrb[0].mxu0 %v412
  %v448 = vpop.f32.mrb[0].mxu0
  %v449 = vadd.f32 0.0, %v448
  %v450 = vpop.f32.mrb[0].mxu0
  %v451 = vpop.f32.mrb[0].mxu0
  %v452 = vpop.f32.mrb[0].mxu0
  %453 = vdwg.mxu0
  %v454 = vadd.f32 %v94, %v449
  %v455 = vmul.f32 %v454, 0.5
  %v456 = vtanh.pop %v455
  %v457 = vmul.f32 %v456, 0.5
  %v458 = vadd.f32 %v457, 0.5
  %v459 = vtanh.pop %v454
  %v461 = vrot.slane %v399, 6
  %v463 = vmul.f32 %v458, %v461
  %465 = vrot.lane.b32.xlu0 %v459, 64
  %v466 = vpop.permute.xlu0 %465
  %v468 = vmul.f32 %v458, %v466
  %470 = vrot.lane.b32.xlu0 %v468, 32
  %v471 = vpop.permute.xlu0 %470
  %v473 = vadd.f32 %v463, %v471
  %v474 = vtanh.pop %v473
  %476 = vrot.lane.b32.xlu0 %v474, 64
  %v477 = vpop.permute.xlu0 %476
  %v479 = vmul.f32 %v458, %v477
  %v480 = vpack.c.bf16 %v479, %v479
  %482 = vrot.lane.b32.xlu0 %v480, 32
  %v483 = vpop.permute.xlu0 %482
  %v485 = vsel %vm109, %v483, 0
  %487 = vmatprep.subr.bf16.mxu0 0
  %488 = vmatpush1.bf16.msra.mxu0 %v105
  %489 = vmatprep.subr.bf16.mxu0 0
  %490 = vmatpush1.bf16.msra.mxu0 %v106
  %491 = vmatprep.subr.bf16.mxu0 0
  %492 = vmatpush1.bf16.msra.mxu0 0
  %493 = vmatprep.subr.bf16.mxu0 0
  %494 = vmatpush1.bf16.msra.mxu0 0
  %495 = vmatprep.subr.bf16.mxu0 0
  %496 = vmatpush1.bf16.msra.mxu0 0
  %497 = vmatprep.subr.bf16.mxu0 0
  %498 = vmatpush1.bf16.msra.mxu0 0
  %499 = vmatprep.subr.bf16.mxu0 0
  %500 = vmatpush1.bf16.msra.mxu0 0
  %501 = vmatprep.subr.bf16.mxu0 0
  %502 = vmatpush1.bf16.msra.mxu0 0
  %503 = vmatprep.subr.bf16.mxu0 0
  %504 = vmatpush1.bf16.msra.mxu0 0
  %505 = vmatprep.subr.bf16.mxu0 0
  %506 = vmatpush1.bf16.msra.mxu0 0
  %507 = vmatprep.subr.bf16.mxu0 0
  %508 = vmatpush1.bf16.msra.mxu0 0
  %509 = vmatprep.subr.bf16.mxu0 0
  %510 = vmatpush1.bf16.msra.mxu0 0
  %511 = vmatprep.subr.bf16.mxu0 0
  %512 = vmatpush1.bf16.msra.mxu0 0
  %513 = vmatprep.subr.bf16.mxu0 0
  %514 = vmatpush1.bf16.msra.mxu0 0
  %515 = vmatprep.subr.bf16.mxu0 0
  %516 = vmatpush1.bf16.msra.mxu0 0
  %517 = vmatprep.subr.bf16.mxu0 0
  %518 = vmatpush1.bf16.msra.mxu0 0
  %519 = vmatprep.mubr.bf16.mxu0 0
  %520 = vmatmul.mubr.bf16.gmra.mrb[0].mxu0 %v485
  %v521 = vpop.f32.mrb[0].mxu0
  %v522 = vadd.f32 0.0, %v521
  %v523 = vpop.f32.mrb[0].mxu0
  %v524 = vpop.f32.mrb[0].mxu0
  %v525 = vpop.f32.mrb[0].mxu0
  %526 = vdwg.mxu0
  %v528 = vrot.slane %v522, 6
  %v530 = vadd.f32 %v94, %v528
  %v531 = vmul.f32 %v530, 0.5
  %v532 = vtanh.pop %v531
  %v533 = vmul.f32 %v532, 0.5
  %v534 = vadd.f32 %v533, 0.5
  %v535 = vtanh.pop %v530
  %v537 = vrot.slane %v473, 6
  %v539 = vmul.f32 %v534, %v537
  %541 = vrot.lane.b32.xlu0 %v535, 64
  %v542 = vpop.permute.xlu0 %541
  %v544 = vmul.f32 %v534, %v542
  %546 = vrot.lane.b32.xlu0 %v544, 32
  %v547 = vpop.permute.xlu0 %546
  %v549 = vadd.f32 %v539, %v547
  %v550 = vtanh.pop %v549
  %552 = vrot.lane.b32.xlu0 %v550, 64
  %v553 = vpop.permute.xlu0 %552
  %v555 = vmul.f32 %v534, %v553
  %v556 = vpack.c.bf16 %v555, %v555
  %v558 = vrot.slane %v556, 1
  %559 = vrot.lane.b32.xlu0 %v558, 32
  %v560 = vpop.permute.xlu0 %559
  %v562 = vsel %vm109, %v560, 0
  %564 = vmatprep.subr.bf16.mxu0 0
  %565 = vmatpush1.bf16.msra.mxu0 %v105
  %566 = vmatprep.subr.bf16.mxu0 0
  %567 = vmatpush1.bf16.msra.mxu0 %v106
  %568 = vmatprep.subr.bf16.mxu0 0
  %569 = vmatpush1.bf16.msra.mxu0 0
  %570 = vmatprep.subr.bf16.mxu0 0
  %571 = vmatpush1.bf16.msra.mxu0 0
  %572 = vmatprep.subr.bf16.mxu0 0
  %573 = vmatpush1.bf16.msra.mxu0 0
  %574 = vmatprep.subr.bf16.mxu0 0
  %575 = vmatpush1.bf16.msra.mxu0 0
  %576 = vmatprep.subr.bf16.mxu0 0
  %577 = vmatpush1.bf16.msra.mxu0 0
  %578 = vmatprep.subr.bf16.mxu0 0
  %579 = vmatpush1.bf16.msra.mxu0 0
  %580 = vmatprep.subr.bf16.mxu0 0
  %581 = vmatpush1.bf16.msra.mxu0 0
  %582 = vmatprep.subr.bf16.mxu0 0
  %583 = vmatpush1.bf16.msra.mxu0 0
  %584 = vmatprep.subr.bf16.mxu0 0
  %585 = vmatpush1.bf16.msra.mxu0 0
  %586 = vmatprep.subr.bf16.mxu0 0
  %587 = vmatpush1.bf16.msra.mxu0 0
  %588 = vmatprep.subr.bf16.mxu0 0
  %589 = vmatpush1.bf16.msra.mxu0 0
  %590 = vmatprep.subr.bf16.mxu0 0
  %591 = vmatpush1.bf16.msra.mxu0 0
  %592 = vmatprep.subr.bf16.mxu0 0
  %593 = vmatpush1.bf16.msra.mxu0 0
  %594 = vmatprep.subr.bf16.mxu0 0
  %595 = vmatpush1.bf16.msra.mxu0 0
  %596 = vmatprep.mubr.bf16.mxu0 0
  %597 = vmatmul.mubr.bf16.gmra.mrb[0].mxu0 %v562
  %v598 = vpop.f32.mrb[0].mxu0
  %v599 = vadd.f32 0.0, %v598
  %v600 = vpop.f32.mrb[0].mxu0
  %v601 = vpop.f32.mrb[0].mxu0
  %v602 = vpop.f32.mrb[0].mxu0
  %603 = vdwg.mxu0
  %v605 = vrot.slane %v599, 4
  %v607 = vadd.f32 %v94, %v605
  %v608 = vmul.f32 %v607, 0.5
  %v609 = vtanh.pop %v608
  %v610 = vmul.f32 %v609, 0.5
  %v611 = vadd.f32 %v610, 0.5
  %v612 = vtanh.pop %v607
  %v614 = vrot.slane %v549, 6
  %v616 = vmul.f32 %v611, %v614
  %618 = vrot.lane.b32.xlu0 %v612, 64
  %v619 = vpop.permute.xlu0 %618
  %v621 = vmul.f32 %v611, %v619
  %623 = vrot.lane.b32.xlu0 %v621, 32
  %v624 = vpop.permute.xlu0 %623
  %v626 = vadd.f32 %v616, %v624
  %v627 = vtanh.pop %v626
  %629 = vrot.lane.b32.xlu0 %v627, 64
  %v630 = vpop.permute.xlu0 %629
  %v632 = vmul.f32 %v611, %v630
  %v633 = vpack.c.bf16 %v632, %v632
  %v635 = vrot.slane %v633, 2
  %636 = vrot.lane.b32.xlu0 %v635, 32
  %v637 = vpop.permute.xlu0 %636
  %v639 = vsel %vm109, %v637, 0
  %641 = vmatprep.subr.bf16.mxu0 0
  %642 = vmatpush1.bf16.msra.mxu0 %v105
  %643 = vmatprep.subr.bf16.mxu0 0
  %644 = vmatpush1.bf16.msra.mxu0 %v106
  %645 = vmatprep.subr.bf16.mxu0 0
  %646 = vmatpush1.bf16.msra.mxu0 0
  %647 = vmatprep.subr.bf16.mxu0 0
  %648 = vmatpush1.bf16.msra.mxu0 0
  %649 = vmatprep.subr.bf16.mxu0 0
  %650 = vmatpush1.bf16.msra.mxu0 0
  %651 = vmatprep.subr.bf16.mxu0 0
  %652 = vmatpush1.bf16.msra.mxu0 0
  %653 = vmatprep.subr.bf16.mxu0 0
  %654 = vmatpush1.bf16.msra.mxu0 0
  %655 = vmatprep.subr.bf16.mxu0 0
  %656 = vmatpush1.bf16.msra.mxu0 0
  %657 = vmatprep.subr.bf16.mxu0 0
  %658 = vmatpush1.bf16.msra.mxu0 0
  %659 = vmatprep.subr.bf16.mxu0 0
  %660 = vmatpush1.bf16.msra.mxu0 0
  %661 = vmatprep.subr.bf16.mxu0 0
  %662 = vmatpush1.bf16.msra.mxu0 0
  %663 = vmatprep.subr.bf16.mxu0 0
  %664 = vmatpush1.bf16.msra.mxu0 0
  %665 = vmatprep.subr.bf16.mxu0 0
  %666 = vmatpush1.bf16.msra.mxu0 0
  %667 = vmatprep.subr.bf16.mxu0 0
  %668 = vmatpush1.bf16.msra.mxu0 0
  %669 = vmatprep.subr.bf16.mxu0 0
  %670 = vmatpush1.bf16.msra.mxu0 0
  %671 = vmatprep.subr.bf16.mxu0 0
  %672 = vmatpush1.bf16.msra.mxu0 0
  %673 = vmatprep.mubr.bf16.mxu0 0
  %674 = vmatmul.mubr.bf16.gmra.mrb[0].mxu0 %v639
  %v675 = vpop.f32.mrb[0].mxu0
  %v676 = vadd.f32 0.0, %v675
  %v677 = vpop.f32.mrb[0].mxu0
  %v678 = vpop.f32.mrb[0].mxu0
  %v679 = vpop.f32.mrb[0].mxu0
  %680 = vdwg.mxu0
  %v682 = vrot.slane %v676, 2
  %v684 = vadd.f32 %v94, %v682
  %v685 = vmul.f32 %v684, 0.5
  %v686 = vtanh.pop %v685
  %v687 = vmul.f32 %v686, 0.5
  %v688 = vadd.f32 %v687, 0.5
  %v689 = vtanh.pop %v684
  %v691 = vrot.slane %v626, 6
  %v693 = vmul.f32 %v688, %v691
  %695 = vrot.lane.b32.xlu0 %v689, 64
  %v696 = vpop.permute.xlu0 %695
  %v698 = vmul.f32 %v688, %v696
  %700 = vrot.lane.b32.xlu0 %v698, 32
  %v701 = vpop.permute.xlu0 %700
  %v703 = vadd.f32 %v693, %v701
  %v704 = vtanh.pop %v703
  %706 = vrot.lane.b32.xlu0 %v704, 64
  %v707 = vpop.permute.xlu0 %706
  %v709 = vmul.f32 %v688, %v707
  %v710 = vld [vmem:[%s4] sm:$0xf]
  %v711 = vld [vmem:[%s4 + $0x4] sm:$0xf]
  %v712 = vld [vmem:[%s4 + $0x8] sm:$0xf]
  %v713 = vld [vmem:[%s4 + $0xc] sm:$0xf]
  %v714 = vld [vmem:[%s5] sm:$0xf]
  %v715 = vld [vmem:[%s5 + $0x4] sm:$0xf]
  %v716 = vld [vmem:[%s5 + $0x8] sm:$0xf]
  %v717 = vld [vmem:[%s5 + $0xc] sm:$0xf]
  %v718 = vld [vmem:[%s6] sm:$0x1]
  %v720 = vlaneseq
  %v721 = vshrl.u32 %v720, 7
  %v722 = vsub.s32 0, %v721
  %v723 = vrot.slane %v718, %v722
  %v729 = vunpack.c.l.b16 %v710
  %v730 = vunpack.c.l.b16 %v711
  %v731 = vunpack.c.l.b16 %v712
  %v732 = vunpack.c.l.b16 %v713
  %v733 = vpack.c.b16 %v730, %v729
  %v734 = vpack.c.b16 %v732, %v731
  %737 = vmatprep.subr.bf16.mxu0 0
  %738 = vmatpush1.bf16.msra.mxu0 %v733
  %739 = vmatprep.subr.bf16.mxu0 0
  %740 = vmatpush1.bf16.msra.mxu0 %v734
  %741 = vmatprep.subr.bf16.mxu0 0
  %742 = vmatpush1.bf16.msra.mxu0 0
  %743 = vmatprep.subr.bf16.mxu0 0
  %744 = vmatpush1.bf16.msra.mxu0 0
  %745 = vmatprep.subr.bf16.mxu0 0
  %746 = vmatpush1.bf16.msra.mxu0 0
  %747 = vmatprep.subr.bf16.mxu0 0
  %748 = vmatpush1.bf16.msra.mxu0 0
  %749 = vmatprep.subr.bf16.mxu0 0
  %750 = vmatpush1.bf16.msra.mxu0 0
  %751 = vmatprep.subr.bf16.mxu0 0
  %752 = vmatpush1.bf16.msra.mxu0 0
  %753 = vmatprep.subr.bf16.mxu0 0
  %754 = vmatpush1.bf16.msra.mxu0 0
  %755 = vmatprep.subr.bf16.mxu0 0
  %756 = vmatpush1.bf16.msra.mxu0 0
  %757 = vmatprep.subr.bf16.mxu0 0
  %758 = vmatpush1.bf16.msra.mxu0 0
  %759 = vmatprep.subr.bf16.mxu0 0
  %760 = vmatpush1.bf16.msra.mxu0 0
  %761 = vmatprep.subr.bf16.mxu0 0
  %762 = vmatpush1.bf16.msra.mxu0 0
  %763 = vmatprep.subr.bf16.mxu0 0
  %764 = vmatpush1.bf16.msra.mxu0 0
  %765 = vmatprep.subr.bf16.mxu0 0
  %766 = vmatpush1.bf16.msra.mxu0 0
  %767 = vmatprep.subr.bf16.mxu0 0
  %768 = vmatpush1.bf16.msra.mxu0 0
  %769 = vmatprep.mubr.bf16.mxu0 0
  %770 = vmatmul.mubr.bf16.gmra.mrb[0].mxu0 %v181
  %v771 = vpop.f32.mrb[0].mxu0
  %v772 = vadd.f32 %v723, %v771
  %v773 = vpop.f32.mrb[0].mxu0
  %v774 = vpop.f32.mrb[0].mxu0
  %v775 = vpop.f32.mrb[0].mxu0
  %776 = vdwg.mxu0
  %v781 = vunpack.c.l.b16 %v714
  %v782 = vunpack.c.l.b16 %v715
  %v783 = vunpack.c.l.b16 %v716
  %v784 = vunpack.c.l.b16 %v717
  %v785 = vpack.c.b16 %v782, %v781
  %v786 = vpack.c.b16 %v784, %v783
  %789 = vmatprep.subr.bf16.mxu0 0
  %790 = vmatpush1.bf16.msra.mxu0 %v785
  %791 = vmatprep.subr.bf16.mxu0 0
  %792 = vmatpush1.bf16.msra.mxu0 %v786
  %793 = vmatprep.subr.bf16.mxu0 0
  %794 = vmatpush1.bf16.msra.mxu0 0
  %795 = vmatprep.subr.bf16.mxu0 0
  %796 = vmatpush1.bf16.msra.mxu0 0
  %797 = vmatprep.subr.bf16.mxu0 0
  %798 = vmatpush1.bf16.msra.mxu0 0
  %799 = vmatprep.subr.bf16.mxu0 0
  %800 = vmatpush1.bf16.msra.mxu0 0
  %801 = vmatprep.subr.bf16.mxu0 0
  %802 = vmatpush1.bf16.msra.mxu0 0
  %803 = vmatprep.subr.bf16.mxu0 0
  %804 = vmatpush1.bf16.msra.mxu0 0
  %805 = vmatprep.subr.bf16.mxu0 0
  %806 = vmatpush1.bf16.msra.mxu0 0
  %807 = vmatprep.subr.bf16.mxu0 0
  %808 = vmatpush1.bf16.msra.mxu0 0
  %809 = vmatprep.subr.bf16.mxu0 0
  %810 = vmatpush1.bf16.msra.mxu0 0
  %811 = vmatprep.subr.bf16.mxu0 0
  %812 = vmatpush1.bf16.msra.mxu0 0
  %813 = vmatprep.subr.bf16.mxu0 0
  %814 = vmatpush1.bf16.msra.mxu0 0
  %815 = vmatprep.subr.bf16.mxu0 0
  %816 = vmatpush1.bf16.msra.mxu0 0
  %817 = vmatprep.subr.bf16.mxu0 0
  %818 = vmatpush1.bf16.msra.mxu0 0
  %819 = vmatprep.subr.bf16.mxu0 0
  %820 = vmatpush1.bf16.msra.mxu0 0
  %821 = vmatprep.mubr.bf16.mxu0 0
  %822 = vmatmul.mubr.bf16.gmra.mrb[0].mxu0 %v111
  %v823 = vpop.f32.mrb[0].mxu0
  %v824 = vadd.f32 0.0, %v823
  %v825 = vpop.f32.mrb[0].mxu0
  %v826 = vpop.f32.mrb[0].mxu0
  %v827 = vpop.f32.mrb[0].mxu0
  %828 = vdwg.mxu0
  %v829 = vadd.f32 %v772, %v824
  %v830 = vmul.f32 %v829, 0.5
  %v831 = vtanh.pop %v830
  %v832 = vmul.f32 %v831, 0.5
  %v833 = vadd.f32 %v832, 0.5
  %v834 = vtanh.pop %v829
  %v835 = vmul.f32 %v833, 0.0
  %837 = vrot.lane.b32.xlu0 %v834, 64
  %v838 = vpop.permute.xlu0 %837
  %v840 = vmul.f32 %v833, %v838
  %842 = vrot.lane.b32.xlu0 %v840, 32
  %v843 = vpop.permute.xlu0 %842
  %v845 = vadd.f32 %v835, %v843
  %v846 = vtanh.pop %v845
  %848 = vrot.lane.b32.xlu0 %v846, 64
  %v849 = vpop.permute.xlu0 %848
  %v851 = vmul.f32 %v833, %v849
  %852 = vmatprep.subr.bf16.mxu0 0
  %853 = vmatpush1.bf16.msra.mxu0 %v733
  %854 = vmatprep.subr.bf16.mxu0 0
  %855 = vmatpush1.bf16.msra.mxu0 %v734
  %856 = vmatprep.subr.bf16.mxu0 0
  %857 = vmatpush1.bf16.msra.mxu0 0
  %858 = vmatprep.subr.bf16.mxu0 0
  %859 = vmatpush1.bf16.msra.mxu0 0
  %860 = vmatprep.subr.bf16.mxu0 0
  %861 = vmatpush1.bf16.msra.mxu0 0
  %862 = vmatprep.subr.bf16.mxu0 0
  %863 = vmatpush1.bf16.msra.mxu0 0
  %864 = vmatprep.subr.bf16.mxu0 0
  %865 = vmatpush1.bf16.msra.mxu0 0
  %866 = vmatprep.subr.bf16.mxu0 0
  %867 = vmatpush1.bf16.msra.mxu0 0
  %868 = vmatprep.subr.bf16.mxu0 0
  %869 = vmatpush1.bf16.msra.mxu0 0
  %870 = vmatprep.subr.bf16.mxu0 0
  %871 = vmatpush1.bf16.msra.mxu0 0
  %872 = vmatprep.subr.bf16.mxu0 0
  %873 = vmatpush1.bf16.msra.mxu0 0
  %874 = vmatprep.subr.bf16.mxu0 0
  %875 = vmatpush1.bf16.msra.mxu0 0
  %876 = vmatprep.subr.bf16.mxu0 0
  %877 = vmatpush1.bf16.msra.mxu0 0
  %878 = vmatprep.subr.bf16.mxu0 0
  %879 = vmatpush1.bf16.msra.mxu0 0
  %880 = vmatprep.subr.bf16.mxu0 0
  %881 = vmatpush1.bf16.msra.mxu0 0
  %882 = vmatprep.subr.bf16.mxu0 0
  %883 = vmatpush1.bf16.msra.mxu0 0
  %884 = vmatprep.mubr.bf16.mxu0 0
  %885 = vmatmul.mubr.bf16.gmra.mrb[0].mxu0 %v258
  %v886 = vpop.f32.mrb[0].mxu0
  %v887 = vadd.f32 %v723, %v886
  %v888 = vpop.f32.mrb[0].mxu0
  %v889 = vpop.f32.mrb[0].mxu0
  %v890 = vpop.f32.mrb[0].mxu0
  %891 = vdwg.mxu0
  %v892 = vpack.c.bf16 %v851, %v851
  %894 = vrot.lane.b32.xlu0 %v892, 32
  %v895 = vpop.permute.xlu0 %894
  %v897 = vsel %vm109, %v895, 0
  %899 = vmatprep.subr.bf16.mxu0 0
  %900 = vmatpush1.bf16.msra.mxu0 %v785
  %901 = vmatprep.subr.bf16.mxu0 0
  %902 = vmatpush1.bf16.msra.mxu0 %v786
  %903 = vmatprep.subr.bf16.mxu0 0
  %904 = vmatpush1.bf16.msra.mxu0 0
  %905 = vmatprep.subr.bf16.mxu0 0
  %906 = vmatpush1.bf16.msra.mxu0 0
  %907 = vmatprep.subr.bf16.mxu0 0
  %908 = vmatpush1.bf16.msra.mxu0 0
  %909 = vmatprep.subr.bf16.mxu0 0
  %910 = vmatpush1.bf16.msra.mxu0 0
  %911 = vmatprep.subr.bf16.mxu0 0
  %912 = vmatpush1.bf16.msra.mxu0 0
  %913 = vmatprep.subr.bf16.mxu0 0
  %914 = vmatpush1.bf16.msra.mxu0 0
  %915 = vmatprep.subr.bf16.mxu0 0
  %916 = vmatpush1.bf16.msra.mxu0 0
  %917 = vmatprep.subr.bf16.mxu0 0
  %918 = vmatpush1.bf16.msra.mxu0 0
  %919 = vmatprep.subr.bf16.mxu0 0
  %920 = vmatpush1.bf16.msra.mxu0 0
  %921 = vmatprep.subr.bf16.mxu0 0
  %922 = vmatpush1.bf16.msra.mxu0 0
  %923 = vmatprep.subr.bf16.mxu0 0
  %924 = vmatpush1.bf16.msra.mxu0 0
  %925 = vmatprep.subr.bf16.mxu0 0
  %926 = vmatpush1.bf16.msra.mxu0 0
  %927 = vmatprep.subr.bf16.mxu0 0
  %928 = vmatpush1.bf16.msra.mxu0 0
  %929 = vmatprep.subr.bf16.mxu0 0
  %930 = vmatpush1.bf16.msra.mxu0 0
  %931 = vmatprep.mubr.bf16.mxu0 0
  %932 = vmatmul.mubr.bf16.gmra.mrb[0].mxu0 %v897
  %v933 = vpop.f32.mrb[0].mxu0
  %v934 = vadd.f32 0.0, %v933
  %v935 = vpop.f32.mrb[0].mxu0
  %v936 = vpop.f32.mrb[0].mxu0
  %v937 = vpop.f32.mrb[0].mxu0
  %938 = vdwg.mxu0
  %v939 = vadd.f32 %v887, %v934
  %v940 = vmul.f32 %v939, 0.5
  %v941 = vtanh.pop %v940
  %v942 = vmul.f32 %v941, 0.5
  %v943 = vadd.f32 %v942, 0.5
  %v944 = vtanh.pop %v939
  %v945 = vmul.f32 %v943, %v845
  %947 = vrot.lane.b32.xlu0 %v944, 64
  %v948 = vpop.permute.xlu0 %947
  %v950 = vmul.f32 %v943, %v948
  %952 = vrot.lane.b32.xlu0 %v950, 32
  %v953 = vpop.permute.xlu0 %952
  %v955 = vadd.f32 %v945, %v953
  %v956 = vtanh.pop %v955
  %958 = vrot.lane.b32.xlu0 %v956, 64
  %v959 = vpop.permute.xlu0 %958
  %v961 = vmul.f32 %v943, %v959
  %962 = vmatprep.subr.bf16.mxu0 0
  %963 = vmatpush1.bf16.msra.mxu0 %v733
  %964 = vmatprep.subr.bf16.mxu0 0
  %965 = vmatpush1.bf16.msra.mxu0 %v734
  %966 = vmatprep.subr.bf16.mxu0 0
  %967 = vmatpush1.bf16.msra.mxu0 0
  %968 = vmatprep.subr.bf16.mxu0 0
  %969 = vmatpush1.bf16.msra.mxu0 0
  %970 = vmatprep.subr.bf16.mxu0 0
  %971 = vmatpush1.bf16.msra.mxu0 0
  %972 = vmatprep.subr.bf16.mxu0 0
  %973 = vmatpush1.bf16.msra.mxu0 0
  %974 = vmatprep.subr.bf16.mxu0 0
  %975 = vmatpush1.bf16.msra.mxu0 0
  %976 = vmatprep.subr.bf16.mxu0 0
  %977 = vmatpush1.bf16.msra.mxu0 0
  %978 = vmatprep.subr.bf16.mxu0 0
  %979 = vmatpush1.bf16.msra.mxu0 0
  %980 = vmatprep.subr.bf16.mxu0 0
  %981 = vmatpush1.bf16.msra.mxu0 0
  %982 = vmatprep.subr.bf16.mxu0 0
  %983 = vmatpush1.bf16.msra.mxu0 0
  %984 = vmatprep.subr.bf16.mxu0 0
  %985 = vmatpush1.bf16.msra.mxu0 0
  %986 = vmatprep.subr.bf16.mxu0 0
  %987 = vmatpush1.bf16.msra.mxu0 0
  %988 = vmatprep.subr.bf16.mxu0 0
  %989 = vmatpush1.bf16.msra.mxu0 0
  %990 = vmatprep.subr.bf16.mxu0 0
  %991 = vmatpush1.bf16.msra.mxu0 0
  %992 = vmatprep.subr.bf16.mxu0 0
  %993 = vmatpush1.bf16.msra.mxu0 0
  %994 = vmatprep.mubr.bf16.mxu0 0
  %995 = vmatmul.mubr.bf16.gmra.mrb[0].mxu0 %v335
  %v996 = vpop.f32.mrb[0].mxu0
  %v997 = vadd.f32 %v723, %v996
  %v998 = vpop.f32.mrb[0].mxu0
  %v999 = vpop.f32.mrb[0].mxu0
  %v1000 = vpop.f32.mrb[0].mxu0
  %1001 = vdwg.mxu0
  %v1002 = vpack.c.bf16 %v961, %v961
  %1004 = vrot.lane.b32.xlu0 %v1002, 32
  %v1005 = vpop.permute.xlu0 %1004
  %v1007 = vsel %vm109, %v1005, 0
  %1009 = vmatprep.subr.bf16.mxu0 0
  %1010 = vmatpush1.bf16.msra.mxu0 %v785
  %1011 = vmatprep.subr.bf16.mxu0 0
  %1012 = vmatpush1.bf16.msra.mxu0 %v786
  %1013 = vmatprep.subr.bf16.mxu0 0
  %1014 = vmatpush1.bf16.msra.mxu0 0
  %1015 = vmatprep.subr.bf16.mxu0 0
  %1016 = vmatpush1.bf16.msra.mxu0 0
  %1017 = vmatprep.subr.bf16.mxu0 0
  %1018 = vmatpush1.bf16.msra.mxu0 0
  %1019 = vmatprep.subr.bf16.mxu0 0
  %1020 = vmatpush1.bf16.msra.mxu0 0
  %1021 = vmatprep.subr.bf16.mxu0 0
  %1022 = vmatpush1.bf16.msra.mxu0 0
  %1023 = vmatprep.subr.bf16.mxu0 0
  %1024 = vmatpush1.bf16.msra.mxu0 0
  %1025 = vmatprep.subr.bf16.mxu0 0
  %1026 = vmatpush1.bf16.msra.mxu0 0
  %1027 = vmatprep.subr.bf16.mxu0 0
  %1028 = vmatpush1.bf16.msra.mxu0 0
  %1029 = vmatprep.subr.bf16.mxu0 0
  %1030 = vmatpush1.bf16.msra.mxu0 0
  %1031 = vmatprep.subr.bf16.mxu0 0
  %1032 = vmatpush1.bf16.msra.mxu0 0
  %1033 = vmatprep.subr.bf16.mxu0 0
  %1034 = vmatpush1.bf16.msra.mxu0 0
  %1035 = vmatprep.subr.bf16.mxu0 0
  %1036 = vmatpush1.bf16.msra.mxu0 0
  %1037 = vmatprep.subr.bf16.mxu0 0
  %1038 = vmatpush1.bf16.msra.mxu0 0
  %1039 = vmatprep.subr.bf16.mxu0 0
  %1040 = vmatpush1.bf16.msra.mxu0 0
  %1041 = vmatprep.mubr.bf16.mxu0 0
  %1042 = vmatmul.mubr.bf16.gmra.mrb[0].mxu0 %v1007
  %v1043 = vpop.f32.mrb[0].mxu0
  %v1044 = vadd.f32 0.0, %v1043
  %v1045 = vpop.f32.mrb[0].mxu0
  %v1046 = vpop.f32.mrb[0].mxu0
  %v1047 = vpop.f32.mrb[0].mxu0
  %1048 = vdwg.mxu0
  %v1049 = vadd.f32 %v997, %v1044
  %v1050 = vmul.f32 %v1049, 0.5
  %v1051 = vtanh.pop %v1050
  %v1052 = vmul.f32 %v1051, 0.5
  %v1053 = vadd.f32 %v1052, 0.5
  %v1054 = vtanh.pop %v1049
  %v1055 = vmul.f32 %v1053, %v955
  %1057 = vrot.lane.b32.xlu0 %v1054, 64
  %v1058 = vpop.permute.xlu0 %1057
  %v1060 = vmul.f32 %v1053, %v1058
  %1062 = vrot.lane.b32.xlu0 %v1060, 32
  %v1063 = vpop.permute.xlu0 %1062
  %v1065 = vadd.f32 %v1055, %v1063
  %v1066 = vtanh.pop %v1065
  %1068 = vrot.lane.b32.xlu0 %v1066, 64
  %v1069 = vpop.permute.xlu0 %1068
  %v1071 = vmul.f32 %v1053, %v1069
  %1072 = vmatprep.subr.bf16.mxu0 0
  %1073 = vmatpush1.bf16.msra.mxu0 %v733
  %1074 = vmatprep.subr.bf16.mxu0 0
  %1075 = vmatpush1.bf16.msra.mxu0 %v734
  %1076 = vmatprep.subr.bf16.mxu0 0
  %1077 = vmatpush1.bf16.msra.mxu0 0
  %1078 = vmatprep.subr.bf16.mxu0 0
  %1079 = vmatpush1.bf16.msra.mxu0 0
  %1080 = vmatprep.subr.bf16.mxu0 0
  %1081 = vmatpush1.bf16.msra.mxu0 0
  %1082 = vmatprep.subr.bf16.mxu0 0
  %1083 = vmatpush1.bf16.msra.mxu0 0
  %1084 = vmatprep.subr.bf16.mxu0 0
  %1085 = vmatpush1.bf16.msra.mxu0 0
  %1086 = vmatprep.subr.bf16.mxu0 0
  %1087 = vmatpush1.bf16.msra.mxu0 0
  %1088 = vmatprep.subr.bf16.mxu0 0
  %1089 = vmatpush1.bf16.msra.mxu0 0
  %1090 = vmatprep.subr.bf16.mxu0 0
  %1091 = vmatpush1.bf16.msra.mxu0 0
  %1092 = vmatprep.subr.bf16.mxu0 0
  %1093 = vmatpush1.bf16.msra.mxu0 0
  %1094 = vmatprep.subr.bf16.mxu0 0
  %1095 = vmatpush1.bf16.msra.mxu0 0
  %1096 = vmatprep.subr.bf16.mxu0 0
  %1097 = vmatpush1.bf16.msra.mxu0 0
  %1098 = vmatprep.subr.bf16.mxu0 0
  %1099 = vmatpush1.bf16.msra.mxu0 0
  %1100 = vmatprep.subr.bf16.mxu0 0
  %1101 = vmatpush1.bf16.msra.mxu0 0
  %1102 = vmatprep.subr.bf16.mxu0 0
  %1103 = vmatpush1.bf16.msra.mxu0 0
  %1104 = vmatprep.mubr.bf16.mxu0 0
  %1105 = vmatmul.mubr.bf16.gmra.mrb[0].mxu0 %v412
  %v1106 = vpop.f32.mrb[0].mxu0
  %v1107 = vadd.f32 %v723, %v1106
  %v1108 = vpop.f32.mrb[0].mxu0
  %v1109 = vpop.f32.mrb[0].mxu0
  %v1110 = vpop.f32.mrb[0].mxu0
  %1111 = vdwg.mxu0
  %v1112 = vpack.c.bf16 %v1071, %v1071
  %1114 = vrot.lane.b32.xlu0 %v1112, 32
  %v1115 = vpop.permute.xlu0 %1114
  %v1117 = vsel %vm109, %v1115, 0
  %1119 = vmatprep.subr.bf16.mxu0 0
  %1120 = vmatpush1.bf16.msra.mxu0 %v785
  %1121 = vmatprep.subr.bf16.mxu0 0
  %1122 = vmatpush1.bf16.msra.mxu0 %v786
  %1123 = vmatprep.subr.bf16.mxu0 0
  %1124 = vmatpush1.bf16.msra.mxu0 0
  %1125 = vmatprep.subr.bf16.mxu0 0
  %1126 = vmatpush1.bf16.msra.mxu0 0
  %1127 = vmatprep.subr.bf16.mxu0 0
  %1128 = vmatpush1.bf16.msra.mxu0 0
  %1129 = vmatprep.subr.bf16.mxu0 0
  %1130 = vmatpush1.bf16.msra.mxu0 0
  %1131 = vmatprep.subr.bf16.mxu0 0
  %1132 = vmatpush1.bf16.msra.mxu0 0
  %1133 = vmatprep.subr.bf16.mxu0 0
  %1134 = vmatpush1.bf16.msra.mxu0 0
  %1135 = vmatprep.subr.bf16.mxu0 0
  %1136 = vmatpush1.bf16.msra.mxu0 0
  %1137 = vmatprep.subr.bf16.mxu0 0
  %1138 = vmatpush1.bf16.msra.mxu0 0
  %1139 = vmatprep.subr.bf16.mxu0 0
  %1140 = vmatpush1.bf16.msra.mxu0 0
  %1141 = vmatprep.subr.bf16.mxu0 0
  %1142 = vmatpush1.bf16.msra.mxu0 0
  %1143 = vmatprep.subr.bf16.mxu0 0
  %1144 = vmatpush1.bf16.msra.mxu0 0
  %1145 = vmatprep.subr.bf16.mxu0 0
  %1146 = vmatpush1.bf16.msra.mxu0 0
  %1147 = vmatprep.subr.bf16.mxu0 0
  %1148 = vmatpush1.bf16.msra.mxu0 0
  %1149 = vmatprep.subr.bf16.mxu0 0
  %1150 = vmatpush1.bf16.msra.mxu0 0
  %1151 = vmatprep.mubr.bf16.mxu0 0
  %1152 = vmatmul.mubr.bf16.gmra.mrb[0].mxu0 %v1117
  %v1153 = vpop.f32.mrb[0].mxu0
  %v1154 = vadd.f32 0.0, %v1153
  %v1155 = vpop.f32.mrb[0].mxu0
  %v1156 = vpop.f32.mrb[0].mxu0
  %v1157 = vpop.f32.mrb[0].mxu0
  %1158 = vdwg.mxu0
  %v1159 = vadd.f32 %v1107, %v1154
  %v1160 = vmul.f32 %v1159, 0.5
  %v1161 = vtanh.pop %v1160
  %v1162 = vmul.f32 %v1161, 0.5
  %v1163 = vadd.f32 %v1162, 0.5
  %v1164 = vtanh.pop %v1159
  %v1165 = vmul.f32 %v1163, %v1065
  %1167 = vrot.lane.b32.xlu0 %v1164, 64
  %v1168 = vpop.permute.xlu0 %1167
  %v1170 = vmul.f32 %v1163, %v1168
  %1172 = vrot.lane.b32.xlu0 %v1170, 32
  %v1173 = vpop.permute.xlu0 %1172
  %v1175 = vadd.f32 %v1165, %v1173
  %v1176 = vtanh.pop %v1175
  %1178 = vrot.lane.b32.xlu0 %v1176, 64
  %v1179 = vpop.permute.xlu0 %1178
  %v1181 = vmul.f32 %v1163, %v1179
  %1182 = vmatprep.subr.bf16.mxu0 0
  %1183 = vmatpush1.bf16.msra.mxu0 %v733
  %1184 = vmatprep.subr.bf16.mxu0 0
  %1185 = vmatpush1.bf16.msra.mxu0 %v734
  %1186 = vmatprep.subr.bf16.mxu0 0
  %1187 = vmatpush1.bf16.msra.mxu0 0
  %1188 = vmatprep.subr.bf16.mxu0 0
  %1189 = vmatpush1.bf16.msra.mxu0 0
  %1190 = vmatprep.subr.bf16.mxu0 0
  %1191 = vmatpush1.bf16.msra.mxu0 0
  %1192 = vmatprep.subr.bf16.mxu0 0
  %1193 = vmatpush1.bf16.msra.mxu0 0
  %1194 = vmatprep.subr.bf16.mxu0 0
  %1195 = vmatpush1.bf16.msra.mxu0 0
  %1196 = vmatprep.subr.bf16.mxu0 0
  %1197 = vmatpush1.bf16.msra.mxu0 0
  %1198 = vmatprep.subr.bf16.mxu0 0
  %1199 = vmatpush1.bf16.msra.mxu0 0
  %1200 = vmatprep.subr.bf16.mxu0 0
  %1201 = vmatpush1.bf16.msra.mxu0 0
  %1202 = vmatprep.subr.bf16.mxu0 0
  %1203 = vmatpush1.bf16.msra.mxu0 0
  %1204 = vmatprep.subr.bf16.mxu0 0
  %1205 = vmatpush1.bf16.msra.mxu0 0
  %1206 = vmatprep.subr.bf16.mxu0 0
  %1207 = vmatpush1.bf16.msra.mxu0 0
  %1208 = vmatprep.subr.bf16.mxu0 0
  %1209 = vmatpush1.bf16.msra.mxu0 0
  %1210 = vmatprep.subr.bf16.mxu0 0
  %1211 = vmatpush1.bf16.msra.mxu0 0
  %1212 = vmatprep.subr.bf16.mxu0 0
  %1213 = vmatpush1.bf16.msra.mxu0 0
  %1214 = vmatprep.mubr.bf16.mxu0 0
  %1215 = vmatmul.mubr.bf16.gmra.mrb[0].mxu0 %v485
  %v1216 = vpop.f32.mrb[0].mxu0
  %v1217 = vadd.f32 %v723, %v1216
  %v1218 = vpop.f32.mrb[0].mxu0
  %v1219 = vpop.f32.mrb[0].mxu0
  %v1220 = vpop.f32.mrb[0].mxu0
  %1221 = vdwg.mxu0
  %v1222 = vpack.c.bf16 %v1181, %v1181
  %1224 = vrot.lane.b32.xlu0 %v1222, 32
  %v1225 = vpop.permute.xlu0 %1224
  %v1227 = vsel %vm109, %v1225, 0
  %1229 = vmatprep.subr.bf16.mxu0 0
  %1230 = vmatpush1.bf16.msra.mxu0 %v785
  %1231 = vmatprep.subr.bf16.mxu0 0
  %1232 = vmatpush1.bf16.msra.mxu0 %v786
  %1233 = vmatprep.subr.bf16.mxu0 0
  %1234 = vmatpush1.bf16.msra.mxu0 0
  %1235 = vmatprep.subr.bf16.mxu0 0
  %1236 = vmatpush1.bf16.msra.mxu0 0
  %1237 = vmatprep.subr.bf16.mxu0 0
  %1238 = vmatpush1.bf16.msra.mxu0 0
  %1239 = vmatprep.subr.bf16.mxu0 0
  %1240 = vmatpush1.bf16.msra.mxu0 0
  %1241 = vmatprep.subr.bf16.mxu0 0
  %1242 = vmatpush1.bf16.msra.mxu0 0
  %1243 = vmatprep.subr.bf16.mxu0 0
  %1244 = vmatpush1.bf16.msra.mxu0 0
  %1245 = vmatprep.subr.bf16.mxu0 0
  %1246 = vmatpush1.bf16.msra.mxu0 0
  %1247 = vmatprep.subr.bf16.mxu0 0
  %1248 = vmatpush1.bf16.msra.mxu0 0
  %1249 = vmatprep.subr.bf16.mxu0 0
  %1250 = vmatpush1.bf16.msra.mxu0 0
  %1251 = vmatprep.subr.bf16.mxu0 0
  %1252 = vmatpush1.bf16.msra.mxu0 0
  %1253 = vmatprep.subr.bf16.mxu0 0
  %1254 = vmatpush1.bf16.msra.mxu0 0
  %1255 = vmatprep.subr.bf16.mxu0 0
  %1256 = vmatpush1.bf16.msra.mxu0 0
  %1257 = vmatprep.subr.bf16.mxu0 0
  %1258 = vmatpush1.bf16.msra.mxu0 0
  %1259 = vmatprep.subr.bf16.mxu0 0
  %1260 = vmatpush1.bf16.msra.mxu0 0
  %1261 = vmatprep.mubr.bf16.mxu0 0
  %1262 = vmatmul.mubr.bf16.gmra.mrb[0].mxu0 %v1227
  %v1263 = vpop.f32.mrb[0].mxu0
  %v1264 = vadd.f32 0.0, %v1263
  %v1265 = vpop.f32.mrb[0].mxu0
  %v1266 = vpop.f32.mrb[0].mxu0
  %v1267 = vpop.f32.mrb[0].mxu0
  %1268 = vdwg.mxu0
  %v1269 = vadd.f32 %v1217, %v1264
  %v1270 = vmul.f32 %v1269, 0.5
  %v1271 = vtanh.pop %v1270
  %v1272 = vmul.f32 %v1271, 0.5
  %v1273 = vadd.f32 %v1272, 0.5
  %v1274 = vtanh.pop %v1269
  %v1275 = vmul.f32 %v1273, %v1175
  %1277 = vrot.lane.b32.xlu0 %v1274, 64
  %v1278 = vpop.permute.xlu0 %1277
  %v1280 = vmul.f32 %v1273, %v1278
  %1282 = vrot.lane.b32.xlu0 %v1280, 32
  %v1283 = vpop.permute.xlu0 %1282
  %v1285 = vadd.f32 %v1275, %v1283
  %v1286 = vtanh.pop %v1285
  %1288 = vrot.lane.b32.xlu0 %v1286, 64
  %v1289 = vpop.permute.xlu0 %1288
  %v1291 = vmul.f32 %v1273, %v1289
  %1292 = vmatprep.subr.bf16.mxu0 0
  %1293 = vmatpush1.bf16.msra.mxu0 %v733
  %1294 = vmatprep.subr.bf16.mxu0 0
  %1295 = vmatpush1.bf16.msra.mxu0 %v734
  %1296 = vmatprep.subr.bf16.mxu0 0
  %1297 = vmatpush1.bf16.msra.mxu0 0
  %1298 = vmatprep.subr.bf16.mxu0 0
  %1299 = vmatpush1.bf16.msra.mxu0 0
  %1300 = vmatprep.subr.bf16.mxu0 0
  %1301 = vmatpush1.bf16.msra.mxu0 0
  %1302 = vmatprep.subr.bf16.mxu0 0
  %1303 = vmatpush1.bf16.msra.mxu0 0
  %1304 = vmatprep.subr.bf16.mxu0 0
  %1305 = vmatpush1.bf16.msra.mxu0 0
  %1306 = vmatprep.subr.bf16.mxu0 0
  %1307 = vmatpush1.bf16.msra.mxu0 0
  %1308 = vmatprep.subr.bf16.mxu0 0
  %1309 = vmatpush1.bf16.msra.mxu0 0
  %1310 = vmatprep.subr.bf16.mxu0 0
  %1311 = vmatpush1.bf16.msra.mxu0 0
  %1312 = vmatprep.subr.bf16.mxu0 0
  %1313 = vmatpush1.bf16.msra.mxu0 0
  %1314 = vmatprep.subr.bf16.mxu0 0
  %1315 = vmatpush1.bf16.msra.mxu0 0
  %1316 = vmatprep.subr.bf16.mxu0 0
  %1317 = vmatpush1.bf16.msra.mxu0 0
  %1318 = vmatprep.subr.bf16.mxu0 0
  %1319 = vmatpush1.bf16.msra.mxu0 0
  %1320 = vmatprep.subr.bf16.mxu0 0
  %1321 = vmatpush1.bf16.msra.mxu0 0
  %1322 = vmatprep.subr.bf16.mxu0 0
  %1323 = vmatpush1.bf16.msra.mxu0 0
  %1324 = vmatprep.mubr.bf16.mxu0 0
  %1325 = vmatmul.mubr.bf16.gmra.mrb[0].mxu0 %v562
  %v1326 = vpop.f32.mrb[0].mxu0
  %v1327 = vadd.f32 %v723, %v1326
  %v1328 = vpop.f32.mrb[0].mxu0
  %v1329 = vpop.f32.mrb[0].mxu0
  %v1330 = vpop.f32.mrb[0].mxu0
  %1331 = vdwg.mxu0
  %v1332 = vpack.c.bf16 %v1291, %v1291
  %1334 = vrot.lane.b32.xlu0 %v1332, 32
  %v1335 = vpop.permute.xlu0 %1334
  %v1337 = vsel %vm109, %v1335, 0
  %1339 = vmatprep.subr.bf16.mxu0 0
  %1340 = vmatpush1.bf16.msra.mxu0 %v785
  %1341 = vmatprep.subr.bf16.mxu0 0
  %1342 = vmatpush1.bf16.msra.mxu0 %v786
  %1343 = vmatprep.subr.bf16.mxu0 0
  %1344 = vmatpush1.bf16.msra.mxu0 0
  %1345 = vmatprep.subr.bf16.mxu0 0
  %1346 = vmatpush1.bf16.msra.mxu0 0
  %1347 = vmatprep.subr.bf16.mxu0 0
  %1348 = vmatpush1.bf16.msra.mxu0 0
  %1349 = vmatprep.subr.bf16.mxu0 0
  %1350 = vmatpush1.bf16.msra.mxu0 0
  %1351 = vmatprep.subr.bf16.mxu0 0
  %1352 = vmatpush1.bf16.msra.mxu0 0
  %1353 = vmatprep.subr.bf16.mxu0 0
  %1354 = vmatpush1.bf16.msra.mxu0 0
  %1355 = vmatprep.subr.bf16.mxu0 0
  %1356 = vmatpush1.bf16.msra.mxu0 0
  %1357 = vmatprep.subr.bf16.mxu0 0
  %1358 = vmatpush1.bf16.msra.mxu0 0
  %1359 = vmatprep.subr.bf16.mxu0 0
  %1360 = vmatpush1.bf16.msra.mxu0 0
  %1361 = vmatprep.subr.bf16.mxu0 0
  %1362 = vmatpush1.bf16.msra.mxu0 0
  %1363 = vmatprep.subr.bf16.mxu0 0
  %1364 = vmatpush1.bf16.msra.mxu0 0
  %1365 = vmatprep.subr.bf16.mxu0 0
  %1366 = vmatpush1.bf16.msra.mxu0 0
  %1367 = vmatprep.subr.bf16.mxu0 0
  %1368 = vmatpush1.bf16.msra.mxu0 0
  %1369 = vmatprep.subr.bf16.mxu0 0
  %1370 = vmatpush1.bf16.msra.mxu0 0
  %1371 = vmatprep.mubr.bf16.mxu0 0
  %1372 = vmatmul.mubr.bf16.gmra.mrb[0].mxu0 %v1337
  %v1373 = vpop.f32.mrb[0].mxu0
  %v1374 = vadd.f32 0.0, %v1373
  %v1375 = vpop.f32.mrb[0].mxu0
  %v1376 = vpop.f32.mrb[0].mxu0
  %v1377 = vpop.f32.mrb[0].mxu0
  %1378 = vdwg.mxu0
  %v1379 = vadd.f32 %v1327, %v1374
  %v1380 = vmul.f32 %v1379, 0.5
  %v1381 = vtanh.pop %v1380
  %v1382 = vmul.f32 %v1381, 0.5
  %v1383 = vadd.f32 %v1382, 0.5
  %v1384 = vtanh.pop %v1379
  %v1385 = vmul.f32 %v1383, %v1285
  %1387 = vrot.lane.b32.xlu0 %v1384, 64
  %v1388 = vpop.permute.xlu0 %1387
  %v1390 = vmul.f32 %v1383, %v1388
  %1392 = vrot.lane.b32.xlu0 %v1390, 32
  %v1393 = vpop.permute.xlu0 %1392
  %v1395 = vadd.f32 %v1385, %v1393
  %v1396 = vtanh.pop %v1395
  %1398 = vrot.lane.b32.xlu0 %v1396, 64
  %v1399 = vpop.permute.xlu0 %1398
  %v1401 = vmul.f32 %v1383, %v1399
  %1402 = vmatprep.subr.bf16.mxu0 0
  %1403 = vmatpush1.bf16.msra.mxu0 %v733
  %1404 = vmatprep.subr.bf16.mxu0 0
  %1405 = vmatpush1.bf16.msra.mxu0 %v734
  %1406 = vmatprep.subr.bf16.mxu0 0
  %1407 = vmatpush1.bf16.msra.mxu0 0
  %1408 = vmatprep.subr.bf16.mxu0 0
  %1409 = vmatpush1.bf16.msra.mxu0 0
  %1410 = vmatprep.subr.bf16.mxu0 0
  %1411 = vmatpush1.bf16.msra.mxu0 0
  %1412 = vmatprep.subr.bf16.mxu0 0
  %1413 = vmatpush1.bf16.msra.mxu0 0
  %1414 = vmatprep.subr.bf16.mxu0 0
  %1415 = vmatpush1.bf16.msra.mxu0 0
  %1416 = vmatprep.subr.bf16.mxu0 0
  %1417 = vmatpush1.bf16.msra.mxu0 0
  %1418 = vmatprep.subr.bf16.mxu0 0
  %1419 = vmatpush1.bf16.msra.mxu0 0
  %1420 = vmatprep.subr.bf16.mxu0 0
  %1421 = vmatpush1.bf16.msra.mxu0 0
  %1422 = vmatprep.subr.bf16.mxu0 0
  %1423 = vmatpush1.bf16.msra.mxu0 0
  %1424 = vmatprep.subr.bf16.mxu0 0
  %1425 = vmatpush1.bf16.msra.mxu0 0
  %1426 = vmatprep.subr.bf16.mxu0 0
  %1427 = vmatpush1.bf16.msra.mxu0 0
  %1428 = vmatprep.subr.bf16.mxu0 0
  %1429 = vmatpush1.bf16.msra.mxu0 0
  %1430 = vmatprep.subr.bf16.mxu0 0
  %1431 = vmatpush1.bf16.msra.mxu0 0
  %1432 = vmatprep.subr.bf16.mxu0 0
  %1433 = vmatpush1.bf16.msra.mxu0 0
  %1434 = vmatprep.mubr.bf16.mxu0 0
  %1435 = vmatmul.mubr.bf16.gmra.mrb[0].mxu0 %v639
  %v1436 = vpop.f32.mrb[0].mxu0
  %v1437 = vadd.f32 %v723, %v1436
  %v1438 = vpop.f32.mrb[0].mxu0
  %v1439 = vpop.f32.mrb[0].mxu0
  %v1440 = vpop.f32.mrb[0].mxu0
  %1441 = vdwg.mxu0
  %v1442 = vpack.c.bf16 %v1401, %v1401
  %1444 = vrot.lane.b32.xlu0 %v1442, 32
  %v1445 = vpop.permute.xlu0 %1444
  %v1447 = vsel %vm109, %v1445, 0
  %1449 = vmatprep.subr.bf16.mxu0 0
  %1450 = vmatpush1.bf16.msra.mxu0 %v785
  %1451 = vmatprep.subr.bf16.mxu0 0
  %1452 = vmatpush1.bf16.msra.mxu0 %v786
  %1453 = vmatprep.subr.bf16.mxu0 0
  %1454 = vmatpush1.bf16.msra.mxu0 0
  %1455 = vmatprep.subr.bf16.mxu0 0
  %1456 = vmatpush1.bf16.msra.mxu0 0
  %1457 = vmatprep.subr.bf16.mxu0 0
  %1458 = vmatpush1.bf16.msra.mxu0 0
  %1459 = vmatprep.subr.bf16.mxu0 0
  %1460 = vmatpush1.bf16.msra.mxu0 0
  %1461 = vmatprep.subr.bf16.mxu0 0
  %1462 = vmatpush1.bf16.msra.mxu0 0
  %1463 = vmatprep.subr.bf16.mxu0 0
  %1464 = vmatpush1.bf16.msra.mxu0 0
  %1465 = vmatprep.subr.bf16.mxu0 0
  %1466 = vmatpush1.bf16.msra.mxu0 0
  %1467 = vmatprep.subr.bf16.mxu0 0
  %1468 = vmatpush1.bf16.msra.mxu0 0
  %1469 = vmatprep.subr.bf16.mxu0 0
  %1470 = vmatpush1.bf16.msra.mxu0 0
  %1471 = vmatprep.subr.bf16.mxu0 0
  %1472 = vmatpush1.bf16.msra.mxu0 0
  %1473 = vmatprep.subr.bf16.mxu0 0
  %1474 = vmatpush1.bf16.msra.mxu0 0
  %1475 = vmatprep.subr.bf16.mxu0 0
  %1476 = vmatpush1.bf16.msra.mxu0 0
  %1477 = vmatprep.subr.bf16.mxu0 0
  %1478 = vmatpush1.bf16.msra.mxu0 0
  %1479 = vmatprep.subr.bf16.mxu0 0
  %1480 = vmatpush1.bf16.msra.mxu0 0
  %1481 = vmatprep.mubr.bf16.mxu0 0
  %1482 = vmatmul.mubr.bf16.gmra.mrb[0].mxu0 %v1447
  %v1483 = vpop.f32.mrb[0].mxu0
  %v1484 = vadd.f32 0.0, %v1483
  %v1485 = vpop.f32.mrb[0].mxu0
  %v1486 = vpop.f32.mrb[0].mxu0
  %v1487 = vpop.f32.mrb[0].mxu0
  %1488 = vdwg.mxu0
  %v1489 = vadd.f32 %v1437, %v1484
  %v1490 = vmul.f32 %v1489, 0.5
  %v1491 = vtanh.pop %v1490
  %v1492 = vmul.f32 %v1491, 0.5
  %v1493 = vadd.f32 %v1492, 0.5
  %v1494 = vtanh.pop %v1489
  %v1495 = vmul.f32 %v1493, %v1395
  %1497 = vrot.lane.b32.xlu0 %v1494, 64
  %v1498 = vpop.permute.xlu0 %1497
  %v1500 = vmul.f32 %v1493, %v1498
  %1502 = vrot.lane.b32.xlu0 %v1500, 32
  %v1503 = vpop.permute.xlu0 %1502
  %v1505 = vadd.f32 %v1495, %v1503
  %v1506 = vtanh.pop %v1505
  %1508 = vrot.lane.b32.xlu0 %v1506, 64
  %v1509 = vpop.permute.xlu0 %1508
  %v1511 = vmul.f32 %v1493, %v1509
  %v1512 = vpack.c.bf16 %v709, %v709
  %v1514 = vrot.slane %v1512, 3
  %1515 = vrot.lane.b32.xlu0 %v1514, 32
  %v1516 = vpop.permute.xlu0 %1515
  %v1518 = vsel %vm109, %v1516, 0
  %1520 = vmatprep.subr.bf16.mxu0 0
  %1521 = vmatpush1.bf16.msra.mxu0 %v733
  %1522 = vmatprep.subr.bf16.mxu0 0
  %1523 = vmatpush1.bf16.msra.mxu0 %v734
  %1524 = vmatprep.subr.bf16.mxu0 0
  %1525 = vmatpush1.bf16.msra.mxu0 0
  %1526 = vmatprep.subr.bf16.mxu0 0
  %1527 = vmatpush1.bf16.msra.mxu0 0
  %1528 = vmatprep.subr.bf16.mxu0 0
  %1529 = vmatpush1.bf16.msra.mxu0 0
  %1530 = vmatprep.subr.bf16.mxu0 0
  %1531 = vmatpush1.bf16.msra.mxu0 0
  %1532 = vmatprep.subr.bf16.mxu0 0
  %1533 = vmatpush1.bf16.msra.mxu0 0
  %1534 = vmatprep.subr.bf16.mxu0 0
  %1535 = vmatpush1.bf16.msra.mxu0 0
  %1536 = vmatprep.subr.bf16.mxu0 0
  %1537 = vmatpush1.bf16.msra.mxu0 0
  %1538 = vmatprep.subr.bf16.mxu0 0
  %1539 = vmatpush1.bf16.msra.mxu0 0
  %1540 = vmatprep.subr.bf16.mxu0 0
  %1541 = vmatpush1.bf16.msra.mxu0 0
  %1542 = vmatprep.subr.bf16.mxu0 0
  %1543 = vmatpush1.bf16.msra.mxu0 0
  %1544 = vmatprep.subr.bf16.mxu0 0
  %1545 = vmatpush1.bf16.msra.mxu0 0
  %1546 = vmatprep.subr.bf16.mxu0 0
  %1547 = vmatpush1.bf16.msra.mxu0 0
  %1548 = vmatprep.subr.bf16.mxu0 0
  %1549 = vmatpush1.bf16.msra.mxu0 0
  %1550 = vmatprep.subr.bf16.mxu0 0
  %1551 = vmatpush1.bf16.msra.mxu0 0
  %1552 = vmatprep.mubr.bf16.mxu0 0
  %1553 = vmatmul.mubr.bf16.gmra.mrb[0].mxu0 %v1518
  %v1554 = vpop.f32.mrb[0].mxu0
  %v1555 = vadd.f32 %v723, %v1554
  %v1556 = vpop.f32.mrb[0].mxu0
  %v1557 = vpop.f32.mrb[0].mxu0
  %v1558 = vpop.f32.mrb[0].mxu0
  %1559 = vdwg.mxu0
  %v1560 = vpack.c.bf16 %v1511, %v1511
  %1562 = vrot.lane.b32.xlu0 %v1560, 32
  %v1563 = vpop.permute.xlu0 %1562
  %v1565 = vsel %vm109, %v1563, 0
  %1567 = vmatprep.subr.bf16.mxu0 0
  %1568 = vmatpush1.bf16.msra.mxu0 %v785
  %1569 = vmatprep.subr.bf16.mxu0 0
  %1570 = vmatpush1.bf16.msra.mxu0 %v786
  %1571 = vmatprep.subr.bf16.mxu0 0
  %1572 = vmatpush1.bf16.msra.mxu0 0
  %1573 = vmatprep.subr.bf16.mxu0 0
  %1574 = vmatpush1.bf16.msra.mxu0 0
  %1575 = vmatprep.subr.bf16.mxu0 0
  %1576 = vmatpush1.bf16.msra.mxu0 0
  %1577 = vmatprep.subr.bf16.mxu0 0
  %1578 = vmatpush1.bf16.msra.mxu0 0
  %1579 = vmatprep.subr.bf16.mxu0 0
  %1580 = vmatpush1.bf16.msra.mxu0 0
  %1581 = vmatprep.subr.bf16.mxu0 0
  %1582 = vmatpush1.bf16.msra.mxu0 0
  %1583 = vmatprep.subr.bf16.mxu0 0
  %1584 = vmatpush1.bf16.msra.mxu0 0
  %1585 = vmatprep.subr.bf16.mxu0 0
  %1586 = vmatpush1.bf16.msra.mxu0 0
  %1587 = vmatprep.subr.bf16.mxu0 0
  %1588 = vmatpush1.bf16.msra.mxu0 0
  %1589 = vmatprep.subr.bf16.mxu0 0
  %1590 = vmatpush1.bf16.msra.mxu0 0
  %1591 = vmatprep.subr.bf16.mxu0 0
  %1592 = vmatpush1.bf16.msra.mxu0 0
  %1593 = vmatprep.subr.bf16.mxu0 0
  %1594 = vmatpush1.bf16.msra.mxu0 0
  %1595 = vmatprep.subr.bf16.mxu0 0
  %1596 = vmatpush1.bf16.msra.mxu0 0
  %1597 = vmatprep.subr.bf16.mxu0 0
  %1598 = vmatpush1.bf16.msra.mxu0 0
  %1599 = vmatprep.mubr.bf16.mxu0 0
  %1600 = vmatmul.mubr.bf16.gmra.mrb[0].mxu0 %v1565
  %v1601 = vpop.f32.mrb[0].mxu0
  %v1602 = vadd.f32 0.0, %v1601
  %v1603 = vpop.f32.mrb[0].mxu0
  %v1604 = vpop.f32.mrb[0].mxu0
  %v1605 = vpop.f32.mrb[0].mxu0
  %1606 = vdwg.mxu0
  %v1607 = vadd.f32 %v1555, %v1602
  %v1608 = vmul.f32 %v1607, 0.5
  %v1609 = vtanh.pop %v1608
  %v1610 = vmul.f32 %v1609, 0.5
  %v1611 = vadd.f32 %v1610, 0.5
  %v1612 = vtanh.pop %v1607
  %v1613 = vmul.f32 %v1611, %v1505
  %1615 = vrot.lane.b32.xlu0 %v1612, 64
  %v1616 = vpop.permute.xlu0 %1615
  %v1618 = vmul.f32 %v1611, %v1616
  %1620 = vrot.lane.b32.xlu0 %v1618, 32
  %v1621 = vpop.permute.xlu0 %1620
  %v1623 = vadd.f32 %v1613, %v1621
  %v1624 = vtanh.pop %v1623
  %1626 = vrot.lane.b32.xlu0 %v1624, 64
  %v1627 = vpop.permute.xlu0 %1626
  %v1629 = vmul.f32 %v1611, %v1627
  %v1631 = vrot.slane %v709, 6
  %v1634 = vrot.slane %v1629, 6
  %v1636 = vsel %vm52, %v1631, %v1634
  %v1637 = vpack.c.bf16 %v1636, %v1636
  %v1638 = vld [vmem:[%s7] sm:$0xf]
  %v1639 = vld [vmem:[%s7 + $0x4] sm:$0xf]
  %v1640 = vld [vmem:[%s7 + $0x8] sm:$0xf]
  %v1641 = vld [vmem:[%s7 + $0xc] sm:$0xf]
  %v1642 = vld [vmem:[%s8] sm:$0x1]
  %v1644 = vlaneseq
  %v1645 = vshrl.u32 %v1644, 7
  %v1646 = vsub.s32 0, %v1645
  %v1647 = vrot.slane %v1642, %v1646
  %1650 = vrot.lane.b32.xlu0 %v1637, 32
  %v1651 = vpop.permute.xlu0 %1650
  %v1656 = vunpack.c.l.b16 %v1638
  %v1657 = vunpack.c.l.b16 %v1639
  %v1658 = vunpack.c.l.b16 %v1640
  %v1659 = vunpack.c.l.b16 %v1641
  %v1660 = vpack.c.b16 %v1657, %v1656
  %v1661 = vpack.c.b16 %v1659, %v1658
  %v1665 = vsel %vm109, %v1651, 0
  %1667 = vmatprep.subr.bf16.mxu0 0
  %1668 = vmatpush1.bf16.msra.mxu0 %v1660
  %1669 = vmatprep.subr.bf16.mxu0 0
  %1670 = vmatpush1.bf16.msra.mxu0 %v1661
  %1671 = vmatprep.subr.bf16.mxu0 0
  %1672 = vmatpush1.bf16.msra.mxu0 0
  %1673 = vmatprep.subr.bf16.mxu0 0
  %1674 = vmatpush1.bf16.msra.mxu0 0
  %1675 = vmatprep.subr.bf16.mxu0 0
  %1676 = vmatpush1.bf16.msra.mxu0 0
  %1677 = vmatprep.subr.bf16.mxu0 0
  %1678 = vmatpush1.bf16.msra.mxu0 0
  %1679 = vmatprep.subr.bf16.mxu0 0
  %1680 = vmatpush1.bf16.msra.mxu0 0
  %1681 = vmatprep.subr.bf16.mxu0 0
  %1682 = vmatpush1.bf16.msra.mxu0 0
  %1683 = vmatprep.subr.bf16.mxu0 0
  %1684 = vmatpush1.bf16.msra.mxu0 0
  %1685 = vmatprep.subr.bf16.mxu0 0
  %1686 = vmatpush1.bf16.msra.mxu0 0
  %1687 = vmatprep.subr.bf16.mxu0 0
  %1688 = vmatpush1.bf16.msra.mxu0 0
  %1689 = vmatprep.subr.bf16.mxu0 0
  %1690 = vmatpush1.bf16.msra.mxu0 0
  %1691 = vmatprep.subr.bf16.mxu0 0
  %1692 = vmatpush1.bf16.msra.mxu0 0
  %1693 = vmatprep.subr.bf16.mxu0 0
  %1694 = vmatpush1.bf16.msra.mxu0 0
  %1695 = vmatprep.subr.bf16.mxu0 0
  %1696 = vmatpush1.bf16.msra.mxu0 0
  %1697 = vmatprep.subr.bf16.mxu0 0
  %1698 = vmatpush1.bf16.msra.mxu0 0
  %1699 = vmatprep.mubr.bf16.mxu0 0
  %1700 = vmatmul.mubr.bf16.gmra.mrb[0].mxu0 %v1665
  %v1701 = vpop.f32.mrb[0].mxu0
  %v1702 = vadd.f32 %v1647, %v1701
  %v1703 = vpop.f32.mrb[0].mxu0
  %v1704 = vpop.f32.mrb[0].mxu0
  %v1705 = vpop.f32.mrb[0].mxu0
  %1706 = vdwg.mxu0
  %v1707 = vmax.f32 %v1702, 0.0
  %1708 = vst [vmem:[%s9] sm:$0xf] %v1707
  // Predicated region
  $region38: #{lstm_forward.1} parent=0 // pred_check
    _
  $region39: #{lstm_forward.1} parent=0 // pred_check_branch
    %1710 = sbr.rel (0) target = $region41
  $region40: #{lstm_forward.1} parent=0 // pred_region
    _
  $region41: #{lstm_forward.1} parent=0 // pred_fallthru
    _
  // Predicated region
  $region42: #{lstm_forward.1} parent=0 // pred_check
    _
  $region43: #{lstm_forward.1} parent=0 // pred_check_branch
    %1712 = sbr.rel (0) target = $region45
  $region44: #{lstm_forward.1} parent=0 // pred_region
    _
  $region45: #{lstm_forward.1} parent=0 // pred_fallthru
    _

</llo_original>
